<compile_context>
chip_gen: v5e
topology: v5e:2x2
jax: 0.10.0
libtpu: 0.0.40
codegen_flags: <defaults>
</compile_context>

<pallas_src>
import functools

import numpy as np
import jax
import jax.numpy as jnp
from jax.experimental import pallas as pl
from jax.experimental.pallas import tpu as pltpu

_EPS = 1e-5  # PyTorch GroupNorm default eps


def _mish(v):
    # mish(v) = v * tanh(softplus(v)), numerically stable softplus.
    sp = jnp.maximum(v, 0.0) + jnp.log(1.0 + jnp.exp(-jnp.abs(v)))
    return v * jnp.tanh(sp)


def _conv3(h, w_taps, bias, keep_prev, keep_next, *, fuse_taps, mdt):
    """k=3 'same' conv as matmuls.  h: (M, C) f32, w_taps: (3C, Cout) in `mdt`.

    keep_prev / keep_next are (M, 1) {0,1} masks that zero the shifted rows at the
    first / last position of every sample (zero padding + no cross-sample bleed).
    """
    m, c = h.shape
    prev = pltpu.roll(h, shift=1, axis=0) * keep_prev        # prev[r] = h[r-1]
    nxt = pltpu.roll(h, shift=m - 1, axis=0) * keep_next     # nxt[r]  = h[r+1]
    if fuse_taps:
        # Lane-aligned concat (C % 128 == 0): one MXU push with K = 3C.
        hcat = jnp.concatenate([prev, h, nxt], axis=-1).astype(mdt)
        y = jnp.dot(hcat, w_taps, preferred_element_type=jnp.float32)
    else:
        y = (jnp.dot(prev.astype(mdt), w_taps[0:c], preferred_element_type=jnp.float32)
             + jnp.dot(h.astype(mdt), w_taps[c:2 * c], preferred_element_type=jnp.float32)
             + jnp.dot(nxt.astype(mdt), w_taps[2 * c:3 * c], preferred_element_type=jnp.float32))
    return y + bias


def _group_norm(h, seg_sum, expand, mcg, mgc, gamma, beta):
    """One-pass GroupNorm over flat (M, C) rows with per-sample statistics.

    seg_sum: (Bt, M) 0/1 per-sample row reducer;   expand: (M, Bt) its transpose.
    mcg: (C, G) group-mean reducer (pre-scaled by 1/(L*Cg));  mgc: (G, C) broadcast.
    """
    s1 = jnp.dot(seg_sum, h, preferred_element_type=jnp.float32)        # (Bt, C)
    s2 = jnp.dot(seg_sum, h * h, preferred_element_type=jnp.float32)    # (Bt, C)
    gmean = jnp.dot(s1, mcg, preferred_element_type=jnp.float32)        # (Bt, G) E[h]
    gmsq = jnp.dot(s2, mcg, preferred_element_type=jnp.float32)         # (Bt, G) E[h^2]
    ginv = jax.lax.rsqrt(gmsq - gmean * gmean + _EPS)                   # (Bt, G)
    mean_c = jnp.dot(gmean, mgc, preferred_element_type=jnp.float32)    # (Bt, C)
    inv_c = jnp.dot(ginv, mgc, preferred_element_type=jnp.float32)      # (Bt, C)
    mean_r = jnp.dot(expand, mean_c, preferred_element_type=jnp.float32)  # (M, C)
    inv_r = jnp.dot(expand, inv_c, preferred_element_type=jnp.float32)    # (M, C)
    return (h - mean_r) * inv_r * gamma + beta


def _cond_res_block_kernel(x_ref, cond_ref, w1_ref, wcs_ref, wcb_ref, w2_ref, wres_ref,
                           vecs_ref, mcg_ref, mgc_ref, out_ref,
                           *, bt, seq_len, fuse_taps, mdt):
    m = x_ref.shape[0]                 # Bt * L rows in this block
    n_cond = cond_ref.shape[0]         # full batch (cond is a tiny constant-index operand)

    x = x_ref[...].astype(jnp.float32)           # (M, Cin) channels-last, rows-flat
    vecs = vecs_ref[...]                         # (9, Cout) packed per-channel vectors
    b1, g1w, g1b = vecs[0:1], vecs[1:2], vecs[2:3]
    bcs, bcb = vecs[3:4], vecs[4:5]
    b2, g2w, g2b = vecs[5:6], vecs[6:7], vecs[7:8]
    bres = vecs[8:9]
    mcg = mcg_ref[...]
    mgc = mgc_ref[...]

    # Per-sample one-hot helpers from 2-D iotas (integer mul/compare only; no div/mod).
    r_mb = jax.lax.broadcasted_iota(jnp.int32, (m, bt), 0)
    c_mb = jax.lax.broadcasted_iota(jnp.int32, (m, bt), 1)
    start = c_mb * seq_len
    expand = jnp.logical_and(r_mb >= start, r_mb < start + seq_len).astype(jnp.float32)  # (M, Bt)
    keep_prev = 1.0 - jnp.sum((r_mb == start).astype(jnp.float32),
                              axis=1, keepdims=True)                                     # (M, 1)
    keep_next = 1.0 - jnp.sum((r_mb == start + (seq_len - 1)).astype(jnp.float32),
                              axis=1, keepdims=True)                                     # (M, 1)
    r_bm = jax.lax.broadcasted_iota(jnp.int32, (bt, m), 0) * seq_len
    c_bm = jax.lax.broadcasted_iota(jnp.int32, (bt, m), 1)
    seg_sum = jnp.logical_and(c_bm >= r_bm, c_bm < r_bm + seq_len).astype(jnp.float32)   # (Bt, M)

    # ---- blocks[0]: Conv1d(k=3, pad=1) -> GroupNorm -> Mish ------------------------
    h = _conv3(x, w1_ref[...], b1, keep_prev, keep_next, fuse_taps=fuse_taps, mdt=mdt)
    h = _mish(_group_norm(h, seg_sum, expand, mcg, mgc, g1w, g1b))

    # ---- FiLM conditioning: Mish(cond) -> Linear, split into (scale, bias) ---------
    b0 = pl.program_id(0) * bt
    r_bb = jax.lax.broadcasted_iota(jnp.int32, (bt, n_cond), 0)
    c_bb = jax.lax.broadcasted_iota(jnp.int32, (bt, n_cond), 1)
    sel = (c_bb == r_bb + b0).astype(jnp.float32)                       # (Bt, B) row selector
    cond_blk = jnp.dot(sel, cond_ref[...].astype(jnp.float32),
                       preferred_element_type=jnp.float32)              # (Bt, cond_dim)
    cm = _mish(cond_blk).astype(mdt)
    scale = jnp.dot(cm, wcs_ref[...], preferred_element_type=jnp.float32) + bcs   # (Bt, Cout)
    fbias = jnp.dot(cm, wcb_ref[...], preferred_element_type=jnp.float32) + bcb   # (Bt, Cout)
    h = (jnp.dot(expand, scale, preferred_element_type=jnp.float32) * h
         + jnp.dot(expand, fbias, preferred_element_type=jnp.float32))

    # ---- blocks[1]: Conv1d(k=3, pad=1) -> GroupNorm -> Mish ------------------------
    h = _conv3(h, w2_ref[...], b2, keep_prev, keep_next, fuse_taps=fuse_taps, mdt=mdt)
    h = _mish(_group_norm(h, seg_sum, expand, mcg, mgc, g2w, g2b))

    # ---- residual 1x1 conv (identity weights passed when Cin == Cout) --------------
    res = jnp.dot(x.astype(mdt), wres_ref[...], preferred_element_type=jnp.float32) + bres
    out_ref[...] = (h + res).astype(out_ref.dtype)


def _pick_bt(batch, seq_len, max_rows):
    """Largest divisor of `batch` whose flat row block (Bt*L) fits the MXU-fill target
    and is 8-row aligned (or covers the whole batch)."""
    best = None
    for d in range(1, batch + 1):
        if batch % d:
            continue
        if d * seq_len > max(max_rows, seq_len):
            continue
        if (d * seq_len) % 8 == 0 or d == batch:
            best = d
    return best if best is not None else batch


def conditional_residual_block_1d(x, cond, params, *, n_groups=8,
                                  matmul_dtype=jnp.float32, max_rows_per_step=256):
    """x: (B, Cin, L), cond: (B, cond_dim) -> (B, Cout, L) float32."""
    B, Cin, L = x.shape
    cond_dim = cond.shape[-1]
    conv1_w = params["conv1_w"]                       # (Cout, Cin, 3)
    Cout = conv1_w.shape[0]
    assert Cout % n_groups == 0
    Cg = Cout // n_groups
    f32 = jnp.float32
    mdt = matmul_dtype

    # NCL -> rows-flat channels-last (B*L, Cin); channels live on the lane axis.
    x_flat = jnp.transpose(x, (0, 2, 1)).reshape(B * L, Cin).astype(f32)
    cond2 = cond.astype(f32)                                   # (B, cond_dim), tiny

    Bt = _pick_bt(B, L, max_rows_per_step)
    steps = B // Bt
    M = Bt * L
    fuse_taps = (Cin % 128 == 0) and (Cout % 128 == 0)

    def taps(w):  # (Cout, C, 3) -> (3*C, Cout), rows ordered [k=0 ; k=1 ; k=2]
        return jnp.transpose(w, (2, 1, 0)).reshape(3 * w.shape[1], w.shape[0]).astype(mdt)

    w1 = taps(conv1_w)                                         # (3*Cin, Cout)
    w2 = taps(params["conv2_w"])                               # (3*Cout, Cout)

    cond_w = params["cond_w"]                                  # (2*Cout, cond_dim)
    cond_b = params["cond_b"]                                  # (2*Cout,)
    wcs = jnp.transpose(cond_w[:Cout, :]).astype(mdt)          # (cond_dim, Cout)
    wcb = jnp.transpose(cond_w[Cout:, :]).astype(mdt)

    if params.get("res_w") is not None:
        wres = jnp.transpose(params["res_w"][:, :, 0]).astype(mdt)   # (Cin, Cout)
        bres = params["res_b"].astype(f32)
    else:
        assert Cin == Cout
        wres = jnp.eye(Cin, dtype=mdt)
        bres = jnp.zeros((Cout,), dtype=f32)

    # All per-channel (Cout,) vectors packed into one operand (one DMA, one VMEM tile).
    vecs = jnp.stack([params["conv1_b"], params["gn1_w"], params["gn1_b"],
                      cond_b[:Cout], cond_b[Cout:],
                      params["conv2_b"], params["gn2_w"], params["gn2_b"],
                      bres], axis=0).astype(f32)               # (9, Cout)

    gid = np.arange(Cout) // Cg
    onehot = (gid[:, None] == np.arange(n_groups)[None, :]).astype(np.float32)
    mcg = jnp.asarray(onehot / float(L * Cg))                  # (Cout, G) group-mean reducer
    mgc = jnp.asarray(onehot.T)                                # (G, Cout) group->channel broadcast

    kernel = functools.partial(_cond_res_block_kernel, bt=Bt, seq_len=L,
                               fuse_taps=fuse_taps, mdt=mdt)

    def const_spec(a):
        nd = a.ndim
        return pl.BlockSpec(a.shape, lambda b, _nd=nd: (0,) * _nd)

    in_specs = [
        pl.BlockSpec((M, Cin), lambda b: (b, 0)),              # x rows for this block
        const_spec(cond2),                                     # full cond (tiny, fetched once)
        const_spec(w1), const_spec(wcs), const_spec(wcb),
        const_spec(w2), const_spec(wres),
        const_spec(vecs), const_spec(mcg), const_spec(mgc),
    ]
    out_spec = pl.BlockSpec((M, Cout), lambda b: (b, 0))

    y_flat = pl.pallas_call(
        kernel,
        out_shape=jax.ShapeDtypeStruct((B * L, Cout), f32),
        grid_spec=pltpu.PrefetchScalarGridSpec(
            num_scalar_prefetch=0,
            grid=(steps,),                       # pipelined over sample blocks
            in_specs=in_specs,
            out_specs=out_spec,
        ),
        compiler_params=pltpu.CompilerParams(
            dimension_semantics=("parallel",),   # megacore sharding on multi-TC chips
            vmem_limit_bytes=64 * 1024 * 1024),
    )(x_flat, cond2, w1, wcs, wcb, w2, wres, vecs, mcg, mgc)

    return jnp.transpose(y_flat.reshape(B, L, Cout), (0, 2, 1))      # (B, Cout, L)


# ---------------------------- numpy reference (float64) ----------------------------
def _reference_forward(x, cond, p, n_groups=8):
    def conv1d(h, w, b, pad):
        N, Cin, L = h.shape
        Cout, _, K = w.shape
        hp = np.pad(h, ((0, 0), (0, 0), (pad, pad)))
        y = np.zeros((N, Cout, L), dtype=np.float64)
        for l in range(L):
            patch = hp[:, :, l:l + K]                       # (N, Cin, K)
            y[:, :, l] = np.einsum("nck,ock->no", patch, w)
        return y + b[None, :, None]

    def group_norm(h, w, b, G, eps=1e-5):
        N, C, L = h.shape
        hg = h.reshape(N, G, C // G, L)
        mean = hg.mean(axis=(2, 3), keepdims=True)
        var = hg.var(axis=(2, 3), keepdims=True)
        hn = ((hg - mean) / np.sqrt(var + eps)).reshape(N, C, L)
        return hn * w[None, :, None] + b[None, :, None]

    def mish(v):
        return v * np.tanh(np.log1p(np.exp(-np.abs(v))) + np.maximum(v, 0.0))

    Cout = p["conv1_w"].shape[0]
    out = mish(group_norm(conv1d(x, p["conv1_w"], p["conv1_b"], 1),
                          p["gn1_w"], p["gn1_b"], n_groups))
    embed = mish(cond) @ p["cond_w"].T + p["cond_b"]
    scale = embed[:, :Cout][:, :, None]
    bias = embed[:, Cout:][:, :, None]
    out = scale * out + bias
    out = mish(group_norm(conv1d(out, p["conv2_w"], p["conv2_b"], 1),
                          p["gn2_w"], p["gn2_b"], n_groups))
    res = conv1d(x, p["res_w"], p["res_b"], 0) if p.get("res_w") is not None else x
    return out + res


if __name__ == "__main__":
    key = jax.random.PRNGKey(0)
    B, Cin, Cout, L, cond_dim, n_groups = 6, 8, 16, 16, 12, 8

    ks = jax.random.split(key, 16)

    def u(k, shape, fan):
        bound = 1.0 / np.sqrt(fan)
        return jax.random.uniform(k, shape, dtype=jnp.float32, minval=-bound, maxval=bound)

    params = {
        "conv1_w": u(ks[0], (Cout, Cin, 3), Cin * 3),
        "conv1_b": u(ks[1], (Cout,), Cin * 3),
        "gn1_w": 1.0 + 0.1 * jax.random.normal(ks[2], (Cout,), dtype=jnp.float32),
        "gn1_b": 0.1 * jax.random.normal(ks[3], (Cout,), dtype=jnp.float32),
        "cond_w": u(ks[4], (2 * Cout, cond_dim), cond_dim),
        "cond_b": u(ks[5], (2 * Cout,), cond_dim),
        "conv2_w": u(ks[6], (Cout, Cout, 3), Cout * 3),
        "conv2_b": u(ks[7], (Cout,), Cout * 3),
        "gn2_w": 1.0 + 0.1 * jax.random.normal(ks[8], (Cout,), dtype=jnp.float32),
        "gn2_b": 0.1 * jax.random.normal(ks[9], (Cout,), dtype=jnp.float32),
        "res_w": u(ks[10], (Cout, Cin, 1), Cin),   # Cin != Cout -> real 1x1 residual conv
        "res_b": u(ks[11], (Cout,), Cin),
    }
    x = jax.random.normal(ks[12], (B, Cin, L), dtype=jnp.float32)
    cond = jax.random.normal(ks[13], (B, cond_dim), dtype=jnp.float32)

    # f32 path, forced to a multi-step grid (Bt=3, 2 steps) to exercise batching + masks.
    fwd = jax.jit(lambda a, c: conditional_residual_block_1d(
        a, c, params, n_groups=n_groups, max_rows_per_step=64))
    y = jax.block_until_ready(fwd(x, cond))
    assert y.shape == (B, Cout, L), y.shape

    p64 = {k: np.asarray(v, dtype=np.float64) for k, v in params.items()}
    y_ref = _reference_forward(np.asarray(x, np.float64), np.asarray(cond, np.float64),
                               p64, n_groups)
    np.testing.assert_allclose(np.asarray(y), y_ref, rtol=2e-4, atol=2e-4)

    # bf16 matmul-operand path (f32 accumulation / norm math): run + loose sanity check.
    fwd_bf16 = jax.jit(lambda a, c: conditional_residual_block_1d(
        a, c, params, n_groups=n_groups, matmul_dtype=jnp.bfloat16))
    y_bf16 = jax.block_until_ready(fwd_bf16(x, cond))
    assert y_bf16.shape == (B, Cout, L)
    assert float(np.max(np.abs(np.asarray(y_bf16) - np.asarray(y)))) < 0.5

    print("KERNEL_OK")
</pallas_src>

<mosaic_0001>
module attributes {stable_mosaic.version = 11 : i64} {
  func.func @_cond_res_block_kernel(%arg0: i32, %arg1: memref<48x8xf32, #tpu.memory_space<vmem>>, %arg2: memref<6x12xf32, #tpu.memory_space<vmem>>, %arg3: memref<24x16xf32, #tpu.memory_space<vmem>>, %arg4: memref<12x16xf32, #tpu.memory_space<vmem>>, %arg5: memref<12x16xf32, #tpu.memory_space<vmem>>, %arg6: memref<48x16xf32, #tpu.memory_space<vmem>>, %arg7: memref<8x16xf32, #tpu.memory_space<vmem>>, %arg8: memref<9x16xf32, #tpu.memory_space<vmem>>, %arg9: memref<16x8xf32, #tpu.memory_space<vmem>>, %arg10: memref<8x16xf32, #tpu.memory_space<vmem>>, %arg11: memref<48x16xf32, #tpu.memory_space<vmem>>) attributes {dimension_semantics = [#tpu.dimension_semantics<parallel>], iteration_bounds = array<i64: 2>, scalar_prefetch = 0 : i64, scratch_operands = 0 : i64, tpu.core_type = #tpu.core_type<tc>, window_params = [{transform_indices = @transform_0, window_bounds = array<i64: 48, 8>}, {pipeline_mode = #tpu.pipeline_mode<synchronous>, transform_indices = @transform_1, window_bounds = array<i64: 6, 12>}, {pipeline_mode = #tpu.pipeline_mode<synchronous>, transform_indices = @transform_2, window_bounds = array<i64: 24, 16>}, {pipeline_mode = #tpu.pipeline_mode<synchronous>, transform_indices = @transform_3, window_bounds = array<i64: 12, 16>}, {pipeline_mode = #tpu.pipeline_mode<synchronous>, transform_indices = @transform_4, window_bounds = array<i64: 12, 16>}, {pipeline_mode = #tpu.pipeline_mode<synchronous>, transform_indices = @transform_5, window_bounds = array<i64: 48, 16>}, {pipeline_mode = #tpu.pipeline_mode<synchronous>, transform_indices = @transform_6, window_bounds = array<i64: 8, 16>}, {pipeline_mode = #tpu.pipeline_mode<synchronous>, transform_indices = @transform_7, window_bounds = array<i64: 9, 16>}, {pipeline_mode = #tpu.pipeline_mode<synchronous>, transform_indices = @transform_8, window_bounds = array<i64: 16, 8>}, {pipeline_mode = #tpu.pipeline_mode<synchronous>, transform_indices = @transform_9, window_bounds = array<i64: 8, 16>}, {transform_indices = @transform_10, window_bounds = array<i64: 48, 16>}]} {
    %c0 = arith.constant 0 : index
    %c0_0 = arith.constant 0 : index
    %0 = vector.load %arg1[%c0, %c0_0] : memref<48x8xf32, #tpu.memory_space<vmem>>, vector<48x8xf32>
    %c0_1 = arith.constant 0 : index
    %c0_2 = arith.constant 0 : index
    %1 = vector.load %arg8[%c0_1, %c0_2] : memref<9x16xf32, #tpu.memory_space<vmem>>, vector<9x16xf32>
    %2 = vector.extract_strided_slice %1 {offsets = [0, 0], sizes = [1, 16], strides = [1, 1]} : vector<9x16xf32> to vector<1x16xf32>
    %3 = vector.extract_strided_slice %1 {offsets = [1, 0], sizes = [1, 16], strides = [1, 1]} : vector<9x16xf32> to vector<1x16xf32>
    %4 = vector.extract_strided_slice %1 {offsets = [2, 0], sizes = [1, 16], strides = [1, 1]} : vector<9x16xf32> to vector<1x16xf32>
    %5 = vector.extract_strided_slice %1 {offsets = [3, 0], sizes = [1, 16], strides = [1, 1]} : vector<9x16xf32> to vector<1x16xf32>
    %6 = vector.extract_strided_slice %1 {offsets = [4, 0], sizes = [1, 16], strides = [1, 1]} : vector<9x16xf32> to vector<1x16xf32>
    %7 = vector.extract_strided_slice %1 {offsets = [5, 0], sizes = [1, 16], strides = [1, 1]} : vector<9x16xf32> to vector<1x16xf32>
    %8 = vector.extract_strided_slice %1 {offsets = [6, 0], sizes = [1, 16], strides = [1, 1]} : vector<9x16xf32> to vector<1x16xf32>
    %9 = vector.extract_strided_slice %1 {offsets = [7, 0], sizes = [1, 16], strides = [1, 1]} : vector<9x16xf32> to vector<1x16xf32>
    %10 = vector.extract_strided_slice %1 {offsets = [8, 0], sizes = [1, 16], strides = [1, 1]} : vector<9x16xf32> to vector<1x16xf32>
    %c0_3 = arith.constant 0 : index
    %c0_4 = arith.constant 0 : index
    %11 = vector.load %arg9[%c0_3, %c0_4] : memref<16x8xf32, #tpu.memory_space<vmem>>, vector<16x8xf32>
    %c0_5 = arith.constant 0 : index
    %c0_6 = arith.constant 0 : index
    %12 = vector.load %arg10[%c0_5, %c0_6] : memref<8x16xf32, #tpu.memory_space<vmem>>, vector<8x16xf32>
    %13 = tpu.iota {dimensions = array<i32: 0>} : vector<48x3xi32>
    %14 = tpu.iota {dimensions = array<i32: 1>} : vector<48x3xi32>
    %c16_i32 = arith.constant 16 : i32
    %15 = vector.broadcast %c16_i32 : i32 to vector<48x3xi32>
    %16 = arith.muli %14, %15 : vector<48x3xi32>
    %17 = arith.cmpi sge, %13, %16 : vector<48x3xi32>
    %c16_i32_7 = arith.constant 16 : i32
    %18 = vector.broadcast %c16_i32_7 : i32 to vector<48x3xi32>
    %19 = arith.addi %16, %18 : vector<48x3xi32>
    %20 = arith.cmpi slt, %13, %19 : vector<48x3xi32>
    %21 = arith.andi %17, %20 : vector<48x3xi1>
    %22 = arith.extui %21 : vector<48x3xi1> to vector<48x3xi32>
    %23 = arith.sitofp %22 : vector<48x3xi32> to vector<48x3xf32>
    %24 = arith.cmpi eq, %13, %16 : vector<48x3xi32>
    %25 = arith.extui %24 : vector<48x3xi1> to vector<48x3xi32>
    %26 = arith.sitofp %25 : vector<48x3xi32> to vector<48x3xf32>
    %cst = arith.constant dense<0.000000e+00> : vector<48xf32>
    %27 = vector.multi_reduction <add>, %26, %cst [1] : vector<48x3xf32> to vector<48xf32>
    %28 = vector.shape_cast %27 : vector<48xf32> to vector<48x1xf32>
    %cst_8 = arith.constant 1.000000e+00 : f32
    %29 = vector.broadcast %cst_8 : f32 to vector<48x1xf32>
    %30 = arith.subf %29, %28 : vector<48x1xf32>
    %c15_i32 = arith.constant 15 : i32
    %31 = vector.broadcast %c15_i32 : i32 to vector<48x3xi32>
    %32 = arith.addi %16, %31 : vector<48x3xi32>
    %33 = arith.cmpi eq, %13, %32 : vector<48x3xi32>
    %34 = arith.extui %33 : vector<48x3xi1> to vector<48x3xi32>
    %35 = arith.sitofp %34 : vector<48x3xi32> to vector<48x3xf32>
    %cst_9 = arith.constant dense<0.000000e+00> : vector<48xf32>
    %36 = vector.multi_reduction <add>, %35, %cst_9 [1] : vector<48x3xf32> to vector<48xf32>
    %37 = vector.shape_cast %36 : vector<48xf32> to vector<48x1xf32>
    %cst_10 = arith.constant 1.000000e+00 : f32
    %38 = vector.broadcast %cst_10 : f32 to vector<48x1xf32>
    %39 = arith.subf %38, %37 : vector<48x1xf32>
    %40 = tpu.iota {dimensions = array<i32: 0>} : vector<3x48xi32>
    %c16_i32_11 = arith.constant 16 : i32
    %41 = vector.broadcast %c16_i32_11 : i32 to vector<3x48xi32>
    %42 = arith.muli %40, %41 : vector<3x48xi32>
    %43 = tpu.iota {dimensions = array<i32: 1>} : vector<3x48xi32>
    %44 = arith.cmpi sge, %43, %42 : vector<3x48xi32>
    %c16_i32_12 = arith.constant 16 : i32
    %45 = vector.broadcast %c16_i32_12 : i32 to vector<3x48xi32>
    %46 = arith.addi %42, %45 : vector<3x48xi32>
    %47 = arith.cmpi slt, %43, %46 : vector<3x48xi32>
    %48 = arith.andi %44, %47 : vector<3x48xi1>
    %49 = arith.extui %48 : vector<3x48xi1> to vector<3x48xi32>
    %50 = arith.sitofp %49 : vector<3x48xi32> to vector<3x48xf32>
    %c0_13 = arith.constant 0 : index
    %c0_14 = arith.constant 0 : index
    %51 = vector.load %arg3[%c0_13, %c0_14] : memref<24x16xf32, #tpu.memory_space<vmem>>, vector<24x16xf32>
    %c1_i32 = arith.constant 1 : i32
    %52 = tpu.dynamic_rotate %0 by %c1_i32 dim 0 : vector<48x8xf32>, i32 -> vector<48x8xf32>
    %53 = vector.broadcast %30 : vector<48x1xf32> to vector<48x8xf32>
    %54 = arith.mulf %52, %53 : vector<48x8xf32>
    %c47_i32 = arith.constant 47 : i32
    %55 = tpu.dynamic_rotate %0 by %c47_i32 dim 0 : vector<48x8xf32>, i32 -> vector<48x8xf32>
    %56 = vector.broadcast %39 : vector<48x1xf32> to vector<48x8xf32>
    %57 = arith.mulf %55, %56 : vector<48x8xf32>
    %58 = vector.extract_strided_slice %51 {offsets = [0, 0], sizes = [8, 16], strides = [1, 1]} : vector<24x16xf32> to vector<8x16xf32>
    %cst_15 = arith.constant dense<0.000000e+00> : vector<48x16xf32>
    %59 = tpu.matmul %54, %58, %cst_15 {dimension_numbers = #tpu.dot_dimension_numbers<[1], [0], [0], [1], [0, 0, 1, 1], [], []>} : vector<48x8xf32>, vector<8x16xf32>, vector<48x16xf32> -> vector<48x16xf32>
    %60 = vector.extract_strided_slice %51 {offsets = [8, 0], sizes = [8, 16], strides = [1, 1]} : vector<24x16xf32> to vector<8x16xf32>
    %cst_16 = arith.constant dense<0.000000e+00> : vector<48x16xf32>
    %61 = tpu.matmul %0, %60, %cst_16 {dimension_numbers = #tpu.dot_dimension_numbers<[1], [0], [0], [1], [0, 0, 1, 1], [], []>} : vector<48x8xf32>, vector<8x16xf32>, vector<48x16xf32> -> vector<48x16xf32>
    %62 = arith.addf %59, %61 : vector<48x16xf32>
    %63 = vector.extract_strided_slice %51 {offsets = [16, 0], sizes = [8, 16], strides = [1, 1]} : vector<24x16xf32> to vector<8x16xf32>
    %cst_17 = arith.constant dense<0.000000e+00> : vector<48x16xf32>
    %64 = tpu.matmul %57, %63, %cst_17 {dimension_numbers = #tpu.dot_dimension_numbers<[1], [0], [0], [1], [0, 0, 1, 1], [], []>} : vector<48x8xf32>, vector<8x16xf32>, vector<48x16xf32> -> vector<48x16xf32>
    %65 = arith.addf %62, %64 : vector<48x16xf32>
    %66 = vector.broadcast %2 : vector<1x16xf32> to vector<48x16xf32>
    %67 = arith.addf %65, %66 : vector<48x16xf32>
    %cst_18 = arith.constant dense<0.000000e+00> : vector<3x16xf32>
    %68 = tpu.matmul %50, %67, %cst_18 {dimension_numbers = #tpu.dot_dimension_numbers<[1], [0], [0], [1], [0, 0, 1, 1], [], []>} : vector<3x48xf32>, vector<48x16xf32>, vector<3x16xf32> -> vector<3x16xf32>
    %69 = arith.mulf %67, %67 : vector<48x16xf32>
    %cst_19 = arith.constant dense<0.000000e+00> : vector<3x16xf32>
    %70 = tpu.matmul %50, %69, %cst_19 {dimension_numbers = #tpu.dot_dimension_numbers<[1], [0], [0], [1], [0, 0, 1, 1], [], []>} : vector<3x48xf32>, vector<48x16xf32>, vector<3x16xf32> -> vector<3x16xf32>
    %cst_20 = arith.constant dense<0.000000e+00> : vector<3x8xf32>
    %71 = tpu.matmul %68, %11, %cst_20 {dimension_numbers = #tpu.dot_dimension_numbers<[1], [0], [0], [1], [0, 0, 1, 1], [], []>} : vector<3x16xf32>, vector<16x8xf32>, vector<3x8xf32> -> vector<3x8xf32>
    %cst_21 = arith.constant dense<0.000000e+00> : vector<3x8xf32>
    %72 = tpu.matmul %70, %11, %cst_21 {dimension_numbers = #tpu.dot_dimension_numbers<[1], [0], [0], [1], [0, 0, 1, 1], [], []>} : vector<3x16xf32>, vector<16x8xf32>, vector<3x8xf32> -> vector<3x8xf32>
    %73 = arith.mulf %71, %71 : vector<3x8xf32>
    %74 = arith.subf %72, %73 : vector<3x8xf32>
    %cst_22 = arith.constant 9.99999974E-6 : f32
    %75 = vector.broadcast %cst_22 : f32 to vector<3x8xf32>
    %76 = arith.addf %74, %75 : vector<3x8xf32>
    %77 = math.rsqrt %76 : vector<3x8xf32>
    %cst_23 = arith.constant dense<0.000000e+00> : vector<3x16xf32>
    %78 = tpu.matmul %71, %12, %cst_23 {dimension_numbers = #tpu.dot_dimension_numbers<[1], [0], [0], [1], [0, 0, 1, 1], [], []>} : vector<3x8xf32>, vector<8x16xf32>, vector<3x16xf32> -> vector<3x16xf32>
    %cst_24 = arith.constant dense<0.000000e+00> : vector<3x16xf32>
    %79 = tpu.matmul %77, %12, %cst_24 {dimension_numbers = #tpu.dot_dimension_numbers<[1], [0], [0], [1], [0, 0, 1, 1], [], []>} : vector<3x8xf32>, vector<8x16xf32>, vector<3x16xf32> -> vector<3x16xf32>
    %cst_25 = arith.constant dense<0.000000e+00> : vector<48x16xf32>
    %80 = tpu.matmul %23, %78, %cst_25 {dimension_numbers = #tpu.dot_dimension_numbers<[1], [0], [0], [1], [0, 0, 1, 1], [], []>} : vector<48x3xf32>, vector<3x16xf32>, vector<48x16xf32> -> vector<48x16xf32>
    %cst_26 = arith.constant dense<0.000000e+00> : vector<48x16xf32>
    %81 = tpu.matmul %23, %79, %cst_26 {dimension_numbers = #tpu.dot_dimension_numbers<[1], [0], [0], [1], [0, 0, 1, 1], [], []>} : vector<48x3xf32>, vector<3x16xf32>, vector<48x16xf32> -> vector<48x16xf32>
    %82 = arith.subf %67, %80 : vector<48x16xf32>
    %83 = arith.mulf %82, %81 : vector<48x16xf32>
    %84 = vector.broadcast %3 : vector<1x16xf32> to vector<48x16xf32>
    %85 = arith.mulf %83, %84 : vector<48x16xf32>
    %86 = vector.broadcast %4 : vector<1x16xf32> to vector<48x16xf32>
    %87 = arith.addf %85, %86 : vector<48x16xf32>
    %cst_27 = arith.constant 0.000000e+00 : f32
    %88 = vector.broadcast %cst_27 : f32 to vector<48x16xf32>
    %89 = arith.maximumf %87, %88 : vector<48x16xf32>
    %90 = math.absf %87 : vector<48x16xf32>
    %cst_28 = arith.constant 0.000000e+00 : f32
    %91 = vector.broadcast %cst_28 : f32 to vector<48x16xf32>
    %92 = arith.subf %91, %90 : vector<48x16xf32>
    %93 = math.exp %92 : vector<48x16xf32>
    %cst_29 = arith.constant 1.000000e+00 : f32
    %94 = vector.broadcast %cst_29 : f32 to vector<48x16xf32>
    %95 = arith.addf %94, %93 : vector<48x16xf32>
    %96 = math.log %95 : vector<48x16xf32>
    %97 = arith.addf %89, %96 : vector<48x16xf32>
    %98 = math.tanh %97 : vector<48x16xf32>
    %99 = arith.mulf %87, %98 : vector<48x16xf32>
    %c3_i32 = arith.constant 3 : i32
    %100 = arith.muli %arg0, %c3_i32 : i32
    %101 = tpu.iota {dimensions = array<i32: 0>} : vector<3x6xi32>
    %102 = tpu.iota {dimensions = array<i32: 1>} : vector<3x6xi32>
    %103 = vector.broadcast %100 : i32 to vector<3x6xi32>
    %104 = arith.addi %101, %103 : vector<3x6xi32>
    %105 = arith.cmpi eq, %102, %104 : vector<3x6xi32>
    %106 = arith.extui %105 : vector<3x6xi1> to vector<3x6xi32>
    %107 = arith.sitofp %106 : vector<3x6xi32> to vector<3x6xf32>
    %c0_30 = arith.constant 0 : index
    %c0_31 = arith.constant 0 : index
    %108 = vector.load %arg2[%c0_30, %c0_31] : memref<6x12xf32, #tpu.memory_space<vmem>>, vector<6x12xf32>
    %cst_32 = arith.constant dense<0.000000e+00> : vector<3x12xf32>
    %109 = tpu.matmul %107, %108, %cst_32 {dimension_numbers = #tpu.dot_dimension_numbers<[1], [0], [0], [1], [0, 0, 1, 1], [], []>} : vector<3x6xf32>, vector<6x12xf32>, vector<3x12xf32> -> vector<3x12xf32>
    %cst_33 = arith.constant 0.000000e+00 : f32
    %110 = vector.broadcast %cst_33 : f32 to vector<3x12xf32>
    %111 = arith.maximumf %109, %110 : vector<3x12xf32>
    %112 = math.absf %109 : vector<3x12xf32>
    %cst_34 = arith.constant 0.000000e+00 : f32
    %113 = vector.broadcast %cst_34 : f32 to vector<3x12xf32>
    %114 = arith.subf %113, %112 : vector<3x12xf32>
    %115 = math.exp %114 : vector<3x12xf32>
    %cst_35 = arith.constant 1.000000e+00 : f32
    %116 = vector.broadcast %cst_35 : f32 to vector<3x12xf32>
    %117 = arith.addf %116, %115 : vector<3x12xf32>
    %118 = math.log %117 : vector<3x12xf32>
    %119 = arith.addf %111, %118 : vector<3x12xf32>
    %120 = math.tanh %119 : vector<3x12xf32>
    %121 = arith.mulf %109, %120 : vector<3x12xf32>
    %c0_36 = arith.constant 0 : index
    %c0_37 = arith.constant 0 : index
    %122 = vector.load %arg4[%c0_36, %c0_37] : memref<12x16xf32, #tpu.memory_space<vmem>>, vector<12x16xf32>
    %cst_38 = arith.constant dense<0.000000e+00> : vector<3x16xf32>
    %123 = tpu.matmul %121, %122, %cst_38 {dimension_numbers = #tpu.dot_dimension_numbers<[1], [0], [0], [1], [0, 0, 1, 1], [], []>} : vector<3x12xf32>, vector<12x16xf32>, vector<3x16xf32> -> vector<3x16xf32>
    %124 = vector.broadcast %5 : vector<1x16xf32> to vector<3x16xf32>
    %125 = arith.addf %123, %124 : vector<3x16xf32>
    %c0_39 = arith.constant 0 : index
    %c0_40 = arith.constant 0 : index
    %126 = vector.load %arg5[%c0_39, %c0_40] : memref<12x16xf32, #tpu.memory_space<vmem>>, vector<12x16xf32>
    %cst_41 = arith.constant dense<0.000000e+00> : vector<3x16xf32>
    %127 = tpu.matmul %121, %126, %cst_41 {dimension_numbers = #tpu.dot_dimension_numbers<[1], [0], [0], [1], [0, 0, 1, 1], [], []>} : vector<3x12xf32>, vector<12x16xf32>, vector<3x16xf32> -> vector<3x16xf32>
    %128 = vector.broadcast %6 : vector<1x16xf32> to vector<3x16xf32>
    %129 = arith.addf %127, %128 : vector<3x16xf32>
    %cst_42 = arith.constant dense<0.000000e+00> : vector<48x16xf32>
    %130 = tpu.matmul %23, %125, %cst_42 {dimension_numbers = #tpu.dot_dimension_numbers<[1], [0], [0], [1], [0, 0, 1, 1], [], []>} : vector<48x3xf32>, vector<3x16xf32>, vector<48x16xf32> -> vector<48x16xf32>
    %131 = arith.mulf %130, %99 : vector<48x16xf32>
    %cst_43 = arith.constant dense<0.000000e+00> : vector<48x16xf32>
    %132 = tpu.matmul %23, %129, %cst_43 {dimension_numbers = #tpu.dot_dimension_numbers<[1], [0], [0], [1], [0, 0, 1, 1], [], []>} : vector<48x3xf32>, vector<3x16xf32>, vector<48x16xf32> -> vector<48x16xf32>
    %133 = arith.addf %131, %132 : vector<48x16xf32>
    %c0_44 = arith.constant 0 : index
    %c0_45 = arith.constant 0 : index
    %134 = vector.load %arg6[%c0_44, %c0_45] : memref<48x16xf32, #tpu.memory_space<vmem>>, vector<48x16xf32>
    %c1_i32_46 = arith.constant 1 : i32
    %135 = tpu.dynamic_rotate %133 by %c1_i32_46 dim 0 : vector<48x16xf32>, i32 -> vector<48x16xf32>
    %136 = vector.broadcast %30 : vector<48x1xf32> to vector<48x16xf32>
    %137 = arith.mulf %135, %136 : vector<48x16xf32>
    %c47_i32_47 = arith.constant 47 : i32
    %138 = tpu.dynamic_rotate %133 by %c47_i32_47 dim 0 : vector<48x16xf32>, i32 -> vector<48x16xf32>
    %139 = vector.broadcast %39 : vector<48x1xf32> to vector<48x16xf32>
    %140 = arith.mulf %138, %139 : vector<48x16xf32>
    %141 = vector.extract_strided_slice %134 {offsets = [0, 0], sizes = [16, 16], strides = [1, 1]} : vector<48x16xf32> to vector<16x16xf32>
    %cst_48 = arith.constant dense<0.000000e+00> : vector<48x16xf32>
    %142 = tpu.matmul %137, %141, %cst_48 {dimension_numbers = #tpu.dot_dimension_numbers<[1], [0], [0], [1], [0, 0, 1, 1], [], []>} : vector<48x16xf32>, vector<16x16xf32>, vector<48x16xf32> -> vector<48x16xf32>
    %143 = vector.extract_strided_slice %134 {offsets = [16, 0], sizes = [16, 16], strides = [1, 1]} : vector<48x16xf32> to vector<16x16xf32>
    %cst_49 = arith.constant dense<0.000000e+00> : vector<48x16xf32>
    %144 = tpu.matmul %133, %143, %cst_49 {dimension_numbers = #tpu.dot_dimension_numbers<[1], [0], [0], [1], [0, 0, 1, 1], [], []>} : vector<48x16xf32>, vector<16x16xf32>, vector<48x16xf32> -> vector<48x16xf32>
    %145 = arith.addf %142, %144 : vector<48x16xf32>
    %146 = vector.extract_strided_slice %134 {offsets = [32, 0], sizes = [16, 16], strides = [1, 1]} : vector<48x16xf32> to vector<16x16xf32>
    %cst_50 = arith.constant dense<0.000000e+00> : vector<48x16xf32>
    %147 = tpu.matmul %140, %146, %cst_50 {dimension_numbers = #tpu.dot_dimension_numbers<[1], [0], [0], [1], [0, 0, 1, 1], [], []>} : vector<48x16xf32>, vector<16x16xf32>, vector<48x16xf32> -> vector<48x16xf32>
    %148 = arith.addf %145, %147 : vector<48x16xf32>
    %149 = vector.broadcast %7 : vector<1x16xf32> to vector<48x16xf32>
    %150 = arith.addf %148, %149 : vector<48x16xf32>
    %cst_51 = arith.constant dense<0.000000e+00> : vector<3x16xf32>
    %151 = tpu.matmul %50, %150, %cst_51 {dimension_numbers = #tpu.dot_dimension_numbers<[1], [0], [0], [1], [0, 0, 1, 1], [], []>} : vector<3x48xf32>, vector<48x16xf32>, vector<3x16xf32> -> vector<3x16xf32>
    %152 = arith.mulf %150, %150 : vector<48x16xf32>
    %cst_52 = arith.constant dense<0.000000e+00> : vector<3x16xf32>
    %153 = tpu.matmul %50, %152, %cst_52 {dimension_numbers = #tpu.dot_dimension_numbers<[1], [0], [0], [1], [0, 0, 1, 1], [], []>} : vector<3x48xf32>, vector<48x16xf32>, vector<3x16xf32> -> vector<3x16xf32>
    %cst_53 = arith.constant dense<0.000000e+00> : vector<3x8xf32>
    %154 = tpu.matmul %151, %11, %cst_53 {dimension_numbers = #tpu.dot_dimension_numbers<[1], [0], [0], [1], [0, 0, 1, 1], [], []>} : vector<3x16xf32>, vector<16x8xf32>, vector<3x8xf32> -> vector<3x8xf32>
    %cst_54 = arith.constant dense<0.000000e+00> : vector<3x8xf32>
    %155 = tpu.matmul %153, %11, %cst_54 {dimension_numbers = #tpu.dot_dimension_numbers<[1], [0], [0], [1], [0, 0, 1, 1], [], []>} : vector<3x16xf32>, vector<16x8xf32>, vector<3x8xf32> -> vector<3x8xf32>
    %156 = arith.mulf %154, %154 : vector<3x8xf32>
    %157 = arith.subf %155, %156 : vector<3x8xf32>
    %cst_55 = arith.constant 9.99999974E-6 : f32
    %158 = vector.broadcast %cst_55 : f32 to vector<3x8xf32>
    %159 = arith.addf %157, %158 : vector<3x8xf32>
    %160 = math.rsqrt %159 : vector<3x8xf32>
    %cst_56 = arith.constant dense<0.000000e+00> : vector<3x16xf32>
    %161 = tpu.matmul %154, %12, %cst_56 {dimension_numbers = #tpu.dot_dimension_numbers<[1], [0], [0], [1], [0, 0, 1, 1], [], []>} : vector<3x8xf32>, vector<8x16xf32>, vector<3x16xf32> -> vector<3x16xf32>
    %cst_57 = arith.constant dense<0.000000e+00> : vector<3x16xf32>
    %162 = tpu.matmul %160, %12, %cst_57 {dimension_numbers = #tpu.dot_dimension_numbers<[1], [0], [0], [1], [0, 0, 1, 1], [], []>} : vector<3x8xf32>, vector<8x16xf32>, vector<3x16xf32> -> vector<3x16xf32>
    %cst_58 = arith.constant dense<0.000000e+00> : vector<48x16xf32>
    %163 = tpu.matmul %23, %161, %cst_58 {dimension_numbers = #tpu.dot_dimension_numbers<[1], [0], [0], [1], [0, 0, 1, 1], [], []>} : vector<48x3xf32>, vector<3x16xf32>, vector<48x16xf32> -> vector<48x16xf32>
    %cst_59 = arith.constant dense<0.000000e+00> : vector<48x16xf32>
    %164 = tpu.matmul %23, %162, %cst_59 {dimension_numbers = #tpu.dot_dimension_numbers<[1], [0], [0], [1], [0, 0, 1, 1], [], []>} : vector<48x3xf32>, vector<3x16xf32>, vector<48x16xf32> -> vector<48x16xf32>
    %165 = arith.subf %150, %163 : vector<48x16xf32>
    %166 = arith.mulf %165, %164 : vector<48x16xf32>
    %167 = vector.broadcast %8 : vector<1x16xf32> to vector<48x16xf32>
    %168 = arith.mulf %166, %167 : vector<48x16xf32>
    %169 = vector.broadcast %9 : vector<1x16xf32> to vector<48x16xf32>
    %170 = arith.addf %168, %169 : vector<48x16xf32>
    %cst_60 = arith.constant 0.000000e+00 : f32
    %171 = vector.broadcast %cst_60 : f32 to vector<48x16xf32>
    %172 = arith.maximumf %170, %171 : vector<48x16xf32>
    %173 = math.absf %170 : vector<48x16xf32>
    %cst_61 = arith.constant 0.000000e+00 : f32
    %174 = vector.broadcast %cst_61 : f32 to vector<48x16xf32>
    %175 = arith.subf %174, %173 : vector<48x16xf32>
    %176 = math.exp %175 : vector<48x16xf32>
    %cst_62 = arith.constant 1.000000e+00 : f32
    %177 = vector.broadcast %cst_62 : f32 to vector<48x16xf32>
    %178 = arith.addf %177, %176 : vector<48x16xf32>
    %179 = math.log %178 : vector<48x16xf32>
    %180 = arith.addf %172, %179 : vector<48x16xf32>
    %181 = math.tanh %180 : vector<48x16xf32>
    %182 = arith.mulf %170, %181 : vector<48x16xf32>
    %c0_63 = arith.constant 0 : index
    %c0_64 = arith.constant 0 : index
    %183 = vector.load %arg7[%c0_63, %c0_64] : memref<8x16xf32, #tpu.memory_space<vmem>>, vector<8x16xf32>
    %cst_65 = arith.constant dense<0.000000e+00> : vector<48x16xf32>
    %184 = tpu.matmul %0, %183, %cst_65 {dimension_numbers = #tpu.dot_dimension_numbers<[1], [0], [0], [1], [0, 0, 1, 1], [], []>} : vector<48x8xf32>, vector<8x16xf32>, vector<48x16xf32> -> vector<48x16xf32>
    %185 = vector.broadcast %10 : vector<1x16xf32> to vector<48x16xf32>
    %186 = arith.addf %184, %185 : vector<48x16xf32>
    %187 = arith.addf %182, %186 : vector<48x16xf32>
    %c0_66 = arith.constant 0 : index
    %c0_67 = arith.constant 0 : index
    %188 = vector.load %arg11[%c0_66, %c0_67] : memref<48x16xf32, #tpu.memory_space<vmem>>, vector<48x16xf32>
    tpu.vector_store %arg11[%c0_66, %c0_67], %187 {strides = array<i32>} : memref<48x16xf32, #tpu.memory_space<vmem>>, vector<48x16xf32>,
    return
  }
  func.func @transform_0(%arg0: i32) -> (i32, i32) {
    %c0_i32 = arith.constant 0 : i32
    %c0_i32_0 = arith.constant 0 : i32
    return %arg0, %c0_i32 : i32, i32
  }
  func.func @transform_1(%arg0: i32) -> (i32, i32) {
    %c0_i32 = arith.constant 0 : i32
    %c0_i32_0 = arith.constant 0 : i32
    %c0_i32_1 = arith.constant 0 : i32
    return %c0_i32, %c0_i32_0 : i32, i32
  }
  func.func @transform_2(%arg0: i32) -> (i32, i32) {
    %c0_i32 = arith.constant 0 : i32
    %c0_i32_0 = arith.constant 0 : i32
    %c0_i32_1 = arith.constant 0 : i32
    return %c0_i32, %c0_i32_0 : i32, i32
  }
  func.func @transform_3(%arg0: i32) -> (i32, i32) {
    %c0_i32 = arith.constant 0 : i32
    %c0_i32_0 = arith.constant 0 : i32
    %c0_i32_1 = arith.constant 0 : i32
    return %c0_i32, %c0_i32_0 : i32, i32
  }
  func.func @transform_4(%arg0: i32) -> (i32, i32) {
    %c0_i32 = arith.constant 0 : i32
    %c0_i32_0 = arith.constant 0 : i32
    %c0_i32_1 = arith.constant 0 : i32
    return %c0_i32, %c0_i32_0 : i32, i32
  }
  func.func @transform_5(%arg0: i32) -> (i32, i32) {
    %c0_i32 = arith.constant 0 : i32
    %c0_i32_0 = arith.constant 0 : i32
    %c0_i32_1 = arith.constant 0 : i32
    return %c0_i32, %c0_i32_0 : i32, i32
  }
  func.func @transform_6(%arg0: i32) -> (i32, i32) {
    %c0_i32 = arith.constant 0 : i32
    %c0_i32_0 = arith.constant 0 : i32
    %c0_i32_1 = arith.constant 0 : i32
    return %c0_i32, %c0_i32_0 : i32, i32
  }
  func.func @transform_7(%arg0: i32) -> (i32, i32) {
    %c0_i32 = arith.constant 0 : i32
    %c0_i32_0 = arith.constant 0 : i32
    %c0_i32_1 = arith.constant 0 : i32
    return %c0_i32, %c0_i32_0 : i32, i32
  }
  func.func @transform_8(%arg0: i32) -> (i32, i32) {
    %c0_i32 = arith.constant 0 : i32
    %c0_i32_0 = arith.constant 0 : i32
    %c0_i32_1 = arith.constant 0 : i32
    return %c0_i32, %c0_i32_0 : i32, i32
  }
  func.func @transform_9(%arg0: i32) -> (i32, i32) {
    %c0_i32 = arith.constant 0 : i32
    %c0_i32_0 = arith.constant 0 : i32
    %c0_i32_1 = arith.constant 0 : i32
    return %c0_i32, %c0_i32_0 : i32, i32
  }
  func.func @transform_10(%arg0: i32) -> (i32, i32) {
    %c0_i32 = arith.constant 0 : i32
    %c0_i32_0 = arith.constant 0 : i32
    return %arg0, %c0_i32 : i32, i32
  }
}

</mosaic_0001>

<llo_original>
// kernel: _lambda_.1
$region0: #{_lambda_.1}
  #allocation0 [shape = 'u32[]', space=smem, size = 0x4, offset = 0x4, fixed_abs, tag = 'smem constant byte address 0x4 - core index']
  #allocation1 [shape = 'u32[72,128]{1,0:T(1,128)}', space=vmem, size = 0x9000, scoped, tag = 'internal scratch']
  %s0 = inlined_call_operand.vmem [shape: f32[96,8], index: 0, kind: input, shape index: {}]
  %s1 = inlined_call_operand.vmem [shape: f32[6,12], index: 1, kind: input, shape index: {}]
  %s2 = inlined_call_operand.vmem [shape: f32[24,16], index: 2, kind: input, shape index: {}]
  %s3 = inlined_call_operand.vmem [shape: f32[12,16], index: 3, kind: input, shape index: {}]
  %s4 = inlined_call_operand.vmem [shape: f32[12,16], index: 4, kind: input, shape index: {}]
  %s5 = inlined_call_operand.vmem [shape: f32[48,16], index: 5, kind: input, shape index: {}]
  %s6 = inlined_call_operand.hbm [shape: f32[8,16], index: 6, kind: input, shape index: {}]
  %s7 = inlined_call_operand.vmem [shape: f32[9,16], index: 7, kind: input, shape index: {}]
  %s8 = inlined_call_operand.vmem [shape: f32[16,8], index: 8, kind: input, shape index: {}]
  %s9 = inlined_call_operand.vmem [shape: f32[8,16], index: 9, kind: input, shape index: {}]
  %s10 = inlined_call_operand.vmem [shape: f32[96,16], index: 10, kind: output, shape index: {}]
  %s11 = sld [smem:[#allocation0]]
  $region77: #{_lambda_.1} parent=0
    _
  %s13 = ssub.s32 1, %s11
  %s14 = scalar_select 0, %s13, %s11
  $region1: #{_lambda_.1} parent=0
    #allocation2 [shape = 'u8[4096]{0}', space=vmem, size = 0x1000, scoped, tag = 'input window, operand 6, single buffered']
    #allocation3 [shape = 's32[2]{0}', space=sflag, size = 0x8, scoped, tag = 'scoped memory for _lambda_.1']
    %15 = vsyncpa [#allocation3], 0
    loop: start=0, step=1, limit=4
    $region2: #{_lambda_.1} parent=1 // loop_pre_header
      _
    $region3: #{_lambda_.1} parent=1 // loop_header
      %s17 = sphi 0, %s21
      %p18 = scmp.ge.s32.totalorder %s17, 4
      %s27 = sphi 0, %s29
      %s30 = sphi 0, %s27
      %s31 = sphi 0, %s30
      %s47 = sphi 0, %s31
      %s51 = sphi 0, %s51
      %s53 = sphi 0, %s51
      %s54 = sphi 0, %s53
      %s68 = sphi 0, %s54
      %s72 = sphi 0, %s72
      %s74 = sphi 0, %s72
      %s75 = sphi 0, %s74
      %s89 = sphi 0, %s75
      %s93 = sphi 0, %s93
      %s95 = sphi 0, %s93
      %s96 = sphi 0, %s95
      %s110 = sphi 0, %s96
      %s114 = sphi 0, %s114
      %s116 = sphi 0, %s114
      %s117 = sphi 0, %s116
      %s131 = sphi 0, %s117
      %s135 = sphi 0, %s135
      %s137 = sphi 0, %s135
      %s138 = sphi 0, %s137
      %s152 = sphi 0, %s138
      %s156 = sphi 0, %s156
      %s158 = sphi 0, %s156
      %s159 = sphi 0, %s158
      %s173 = sphi 0, %s159
      %s177 = sphi 0, %s177
      %s179 = sphi 0, %s177
      %s180 = sphi 0, %s179
      %s194 = sphi 0, %s180
      %s198 = sphi 0, %s198
      %s200 = sphi 0, %s198
      %s201 = sphi 0, %s200
      %s215 = sphi 0, %s201
      %s219 = sphi 0, %s219
      %s221 = sphi 0, %s219
      %s222 = sphi 0, %s221
      %s236 = sphi 0, %s222
      %s242 = sphi 0, %s244
      %s245 = sphi 0, %s242
      %s246 = sphi 0, %s245
      %s262 = sphi 0, %s246
    $region4: #{_lambda_.1} parent=1 // loop_header_branch
      %20 = sbr.rel (%p18) target = $region8
    $region5: #{_lambda_.1} parent=1 // loop_body
      %s22 = ssub.s32 %s17, 1
      %s23 = ssub.s32 %s17, 2
      %s24 = sadd.s32 %s17, 1
      %s25 = ssub.s32 %s17, %s24
      %p26 = scmp.eq.s32.totalorder %s25, 0
      %s28 = sadd.s32 %s27, 1
      %s29 = scalar_select %p26, %s27, %s28
      %p32 = pneg %p26
      %p33 = scmp.eq.s32.totalorder %s17, 1
      %p34 = por %p32, %p33
      %p35 = scmp.ne.s32.totalorder %s27, %s30
      %p36 = scmp.eq.s32.totalorder %s17, 0
      %p37 = por %p35, %p36
      %p38 = scmp.ne.s32.totalorder %s27, %s30
      %p39 = scmp.eq.s32.totalorder %s22, 1
      %p40 = por %p38, %p39
      %p41 = scmp.ne.s32.totalorder %s30, %s31
      %p42 = scmp.eq.s32.totalorder %s22, 0
      %p43 = por %p41, %p42
      %p44 = scmp.ne.s32.totalorder %s30, %s31
      %p45 = scmp.eq.s32.totalorder %s23, 1
      %p46 = por %p44, %p45
      %p48 = scmp.ne.s32.totalorder %s31, %s47
      %p49 = scmp.eq.s32.totalorder %s23, 0
      %p50 = por %p48, %p49
      %s52 = sadd.s32 %s51, 1
      %p55 = scmp.eq.s32.totalorder %s17, 1
      %p56 = scmp.ne.s32.totalorder %s51, %s53
      %p57 = scmp.eq.s32.totalorder %s17, 0
      %p58 = por %p56, %p57
      %p59 = scmp.ne.s32.totalorder %s51, %s53
      %p60 = scmp.eq.s32.totalorder %s22, 1
      %p61 = por %p59, %p60
      %p62 = scmp.ne.s32.totalorder %s53, %s54
      %p63 = scmp.eq.s32.totalorder %s22, 0
      %p64 = por %p62, %p63
      %p65 = scmp.ne.s32.totalorder %s53, %s54
      %p66 = scmp.eq.s32.totalorder %s23, 1
      %p67 = por %p65, %p66
      %p69 = scmp.ne.s32.totalorder %s54, %s68
      %p70 = scmp.eq.s32.totalorder %s23, 0
      %p71 = por %p69, %p70
      %s73 = sadd.s32 %s72, 1
      %p76 = scmp.eq.s32.totalorder %s17, 1
      %p77 = scmp.ne.s32.totalorder %s72, %s74
      %p78 = scmp.eq.s32.totalorder %s17, 0
      %p79 = por %p77, %p78
      %p80 = scmp.ne.s32.totalorder %s72, %s74
      %p81 = scmp.eq.s32.totalorder %s22, 1
      %p82 = por %p80, %p81
      %p83 = scmp.ne.s32.totalorder %s74, %s75
      %p84 = scmp.eq.s32.totalorder %s22, 0
      %p85 = por %p83, %p84
      %p86 = scmp.ne.s32.totalorder %s74, %s75
      %p87 = scmp.eq.s32.totalorder %s23, 1
      %p88 = por %p86, %p87
      %p90 = scmp.ne.s32.totalorder %s75, %s89
      %p91 = scmp.eq.s32.totalorder %s23, 0
      %p92 = por %p90, %p91
      %s94 = sadd.s32 %s93, 1
      %p97 = scmp.eq.s32.totalorder %s17, 1
      %p98 = scmp.ne.s32.totalorder %s93, %s95
      %p99 = scmp.eq.s32.totalorder %s17, 0
      %p100 = por %p98, %p99
      %p101 = scmp.ne.s32.totalorder %s93, %s95
      %p102 = scmp.eq.s32.totalorder %s22, 1
      %p103 = por %p101, %p102
      %p104 = scmp.ne.s32.totalorder %s95, %s96
      %p105 = scmp.eq.s32.totalorder %s22, 0
      %p106 = por %p104, %p105
      %p107 = scmp.ne.s32.totalorder %s95, %s96
      %p108 = scmp.eq.s32.totalorder %s23, 1
      %p109 = por %p107, %p108
      %p111 = scmp.ne.s32.totalorder %s96, %s110
      %p112 = scmp.eq.s32.totalorder %s23, 0
      %p113 = por %p111, %p112
      %s115 = sadd.s32 %s114, 1
      %p118 = scmp.eq.s32.totalorder %s17, 1
      %p119 = scmp.ne.s32.totalorder %s114, %s116
      %p120 = scmp.eq.s32.totalorder %s17, 0
      %p121 = por %p119, %p120
      %p122 = scmp.ne.s32.totalorder %s114, %s116
      %p123 = scmp.eq.s32.totalorder %s22, 1
      %p124 = por %p122, %p123
      %p125 = scmp.ne.s32.totalorder %s116, %s117
      %p126 = scmp.eq.s32.totalorder %s22, 0
      %p127 = por %p125, %p126
      %p128 = scmp.ne.s32.totalorder %s116, %s117
      %p129 = scmp.eq.s32.totalorder %s23, 1
      %p130 = por %p128, %p129
      %p132 = scmp.ne.s32.totalorder %s117, %s131
      %p133 = scmp.eq.s32.totalorder %s23, 0
      %p134 = por %p132, %p133
      %s136 = sadd.s32 %s135, 1
      %p139 = scmp.eq.s32.totalorder %s17, 1
      %p140 = scmp.ne.s32.totalorder %s135, %s137
      %p141 = scmp.eq.s32.totalorder %s17, 0
      %p142 = por %p140, %p141
      %p143 = scmp.ne.s32.totalorder %s135, %s137
      %p144 = scmp.eq.s32.totalorder %s22, 1
      %p145 = por %p143, %p144
      %p146 = scmp.ne.s32.totalorder %s137, %s138
      %p147 = scmp.eq.s32.totalorder %s22, 0
      %p148 = por %p146, %p147
      %p149 = scmp.ne.s32.totalorder %s137, %s138
      %p150 = scmp.eq.s32.totalorder %s23, 1
      %p151 = por %p149, %p150
      %p153 = scmp.ne.s32.totalorder %s138, %s152
      %p154 = scmp.eq.s32.totalorder %s23, 0
      %p155 = por %p153, %p154
      %s157 = sadd.s32 %s156, 1
      %p160 = scmp.eq.s32.totalorder %s17, 1
      %p161 = scmp.ne.s32.totalorder %s156, %s158
      %p162 = scmp.eq.s32.totalorder %s17, 0
      %p163 = por %p161, %p162
      %p164 = scmp.ne.s32.totalorder %s156, %s158
      %p165 = scmp.eq.s32.totalorder %s22, 1
      %p166 = por %p164, %p165
      %p167 = scmp.ne.s32.totalorder %s158, %s159
      %p168 = scmp.eq.s32.totalorder %s22, 0
      %p169 = por %p167, %p168
      %p170 = scmp.ne.s32.totalorder %s158, %s159
      %p171 = scmp.eq.s32.totalorder %s23, 1
      %p172 = por %p170, %p171
      %p174 = scmp.ne.s32.totalorder %s159, %s173
      %p175 = scmp.eq.s32.totalorder %s23, 0
      %p176 = por %p174, %p175
      %s178 = sadd.s32 %s177, 1
      %p181 = scmp.eq.s32.totalorder %s17, 1
      %p182 = scmp.ne.s32.totalorder %s177, %s179
      %p183 = scmp.eq.s32.totalorder %s17, 0
      %p184 = por %p182, %p183
      %p185 = scmp.ne.s32.totalorder %s177, %s179
      %p186 = scmp.eq.s32.totalorder %s22, 1
      %p187 = por %p185, %p186
      %p188 = scmp.ne.s32.totalorder %s179, %s180
      %p189 = scmp.eq.s32.totalorder %s22, 0
      %p190 = por %p188, %p189
      %p191 = scmp.ne.s32.totalorder %s179, %s180
      %p192 = scmp.eq.s32.totalorder %s23, 1
      %p193 = por %p191, %p192
      %p195 = scmp.ne.s32.totalorder %s180, %s194
      %p196 = scmp.eq.s32.totalorder %s23, 0
      %p197 = por %p195, %p196
      %s199 = sadd.s32 %s198, 1
      %p202 = scmp.eq.s32.totalorder %s17, 1
      %p203 = scmp.ne.s32.totalorder %s198, %s200
      %p204 = scmp.eq.s32.totalorder %s17, 0
      %p205 = por %p203, %p204
      %p206 = scmp.ne.s32.totalorder %s198, %s200
      %p207 = scmp.eq.s32.totalorder %s22, 1
      %p208 = por %p206, %p207
      %p209 = scmp.ne.s32.totalorder %s200, %s201
      %p210 = scmp.eq.s32.totalorder %s22, 0
      %p211 = por %p209, %p210
      %p212 = scmp.ne.s32.totalorder %s200, %s201
      %p213 = scmp.eq.s32.totalorder %s23, 1
      %p214 = por %p212, %p213
      %p216 = scmp.ne.s32.totalorder %s201, %s215
      %p217 = scmp.eq.s32.totalorder %s23, 0
      %p218 = por %p216, %p217
      %s220 = sadd.s32 %s219, 1
      %p223 = scmp.eq.s32.totalorder %s17, 1
      %p224 = scmp.ne.s32.totalorder %s219, %s221
      %p225 = scmp.eq.s32.totalorder %s17, 0
      %p226 = por %p224, %p225
      %p227 = scmp.ne.s32.totalorder %s219, %s221
      %p228 = scmp.eq.s32.totalorder %s22, 1
      %p229 = por %p227, %p228
      %p230 = scmp.ne.s32.totalorder %s221, %s222
      %p231 = scmp.eq.s32.totalorder %s22, 0
      %p232 = por %p230, %p231
      %p233 = scmp.ne.s32.totalorder %s221, %s222
      %p234 = scmp.eq.s32.totalorder %s23, 1
      %p235 = por %p233, %p234
      %p237 = scmp.ne.s32.totalorder %s222, %s236
      %p238 = scmp.eq.s32.totalorder %s23, 0
      %p239 = por %p237, %p238
      %s240 = ssub.s32 %s17, %s24
      %p241 = scmp.eq.s32.totalorder %s240, 0
      %s243 = sadd.s32 %s242, 1
      %s244 = scalar_select %p241, %s242, %s243
      %p247 = pneg %p241
      %p248 = scmp.eq.s32.totalorder %s17, 1
      %p249 = por %p247, %p248
      %p250 = scmp.ne.s32.totalorder %s242, %s245
      %p251 = scmp.eq.s32.totalorder %s17, 0
      %p252 = por %p250, %p251
      %p253 = scmp.ne.s32.totalorder %s242, %s245
      %p254 = scmp.eq.s32.totalorder %s22, 1
      %p255 = por %p253, %p254
      %p256 = scmp.ne.s32.totalorder %s245, %s246
      %p257 = scmp.eq.s32.totalorder %s22, 0
      %p258 = por %p256, %p257
      %p259 = scmp.ne.s32.totalorder %s245, %s246
      %p260 = scmp.eq.s32.totalorder %s23, 1
      %p261 = por %p259, %p260
      %p263 = scmp.ne.s32.totalorder %s246, %s262
      %p264 = scmp.eq.s32.totalorder %s23, 0
      %p265 = por %p263, %p264
      %p266 = scmp.le.s32.totalorder 1, %s17
      %p267 = scmp.lt.s32.totalorder %s17, 3
      %p268 = pnand %p266, %p267
      %p269 = pneg %p268
      // Predicated region
      $region9: #{_lambda_.1} parent=5 // pred_check
        _
      $region10: #{_lambda_.1} parent=5 // pred_check_branch
        %271 = sbr.rel (%p268) target = $region12
      $region11: #{_lambda_.1} parent=5 // pred_region
        %s272 = ssub.s32 %s17, 1
        // Predicated region
        $region13: #{_lambda_.1} parent=11 // pred_check
          %p273 = pneg %p64
        $region14: #{_lambda_.1} parent=11 // pred_check_branch
          %275 = sbr.rel (%p273) target = $region16
        $region15: #{_lambda_.1} parent=11 // pred_region
          _
        $region16: #{_lambda_.1} parent=11 // pred_fallthru
          _
        // Predicated region
        $region17: #{_lambda_.1} parent=11 // pred_check
          %p276 = pneg %p85
        $region18: #{_lambda_.1} parent=11 // pred_check_branch
          %278 = sbr.rel (%p276) target = $region20
        $region19: #{_lambda_.1} parent=11 // pred_region
          _
        $region20: #{_lambda_.1} parent=11 // pred_fallthru
          _
        // Predicated region
        $region21: #{_lambda_.1} parent=11 // pred_check
          %p279 = pneg %p106
        $region22: #{_lambda_.1} parent=11 // pred_check_branch
          %281 = sbr.rel (%p279) target = $region24
        $region23: #{_lambda_.1} parent=11 // pred_region
          _
        $region24: #{_lambda_.1} parent=11 // pred_fallthru
          _
        // Predicated region
        $region25: #{_lambda_.1} parent=11 // pred_check
          %p282 = pneg %p127
        $region26: #{_lambda_.1} parent=11 // pred_check_branch
          %284 = sbr.rel (%p282) target = $region28
        $region27: #{_lambda_.1} parent=11 // pred_region
          _
        $region28: #{_lambda_.1} parent=11 // pred_fallthru
          _
        // Predicated region
        $region29: #{_lambda_.1} parent=11 // pred_check
          %p285 = pneg %p148
        $region30: #{_lambda_.1} parent=11 // pred_check_branch
          %287 = sbr.rel (%p285) target = $region32
        $region31: #{_lambda_.1} parent=11 // pred_region
          _
        $region32: #{_lambda_.1} parent=11 // pred_fallthru
          _
        // Predicated region
        $region33: #{_lambda_.1} parent=11 // pred_check
          %p288 = pneg %p169
        $region34: #{_lambda_.1} parent=11 // pred_check_branch
          %290 = sbr.rel (%p288) target = $region36
        $region35: #{_lambda_.1} parent=11 // pred_region
          %292 = vsyncadd [#allocation3], 0
          %s294 = sshll.u32 %s6, 4
          %s295 = int_to_ptr.hbm [resolvable:$true] %s294
          %s296 = sshll.u32 [#allocation2], 4
          %s297 = int_to_ptr.vmem [resolvable:$true] %s296
          %299 = dma.hbm_to_vmem [thread:$0]  %s295, 128, %s297, [#allocation3]
        $region36: #{_lambda_.1} parent=11 // pred_fallthru
          _
        // Predicated region
        $region37: #{_lambda_.1} parent=11 // pred_check
          %p300 = pneg %p190
        $region38: #{_lambda_.1} parent=11 // pred_check_branch
          %302 = sbr.rel (%p300) target = $region40
        $region39: #{_lambda_.1} parent=11 // pred_region
          _
        $region40: #{_lambda_.1} parent=11 // pred_fallthru
          _
        // Predicated region
        $region41: #{_lambda_.1} parent=11 // pred_check
          %p303 = pneg %p211
        $region42: #{_lambda_.1} parent=11 // pred_check_branch
          %305 = sbr.rel (%p303) target = $region44
        $region43: #{_lambda_.1} parent=11 // pred_region
          _
        $region44: #{_lambda_.1} parent=11 // pred_fallthru
          _
        // Predicated region
        $region45: #{_lambda_.1} parent=11 // pred_check
          %p306 = pneg %p232
        $region46: #{_lambda_.1} parent=11 // pred_check_branch
          %308 = sbr.rel (%p306) target = $region48
        $region47: #{_lambda_.1} parent=11 // pred_region
          _
        $region48: #{_lambda_.1} parent=11 // pred_fallthru
          _
      $region12: #{_lambda_.1} parent=5 // pred_fallthru
        _
      %p309 = scmp.lt.s32.totalorder %s17, 2
      // Predicated region
      $region49: #{_lambda_.1} parent=5 // pred_check
        %p310 = pneg %p309
      $region50: #{_lambda_.1} parent=5 // pred_check_branch
        %312 = sbr.rel (%p310) target = $region52
      $region51: #{_lambda_.1} parent=5 // pred_region
        // Predicated region
        $region53: #{_lambda_.1} parent=51 // pred_check
          %p313 = pneg %p37
        $region54: #{_lambda_.1} parent=51 // pred_check_branch
          %315 = sbr.rel (%p313) target = $region56
        $region55: #{_lambda_.1} parent=51 // pred_region
          %s316 = smul.u32 6, %s17
          %p317 = scmp.lt.s32.totalorder %s316, 11
          %s318 = scalar_select %p317, %s316, 11
          %s319 = smul.addr %s318, 8
          %s320 = scalar_lea.vmem %s0, %s319
          %s321 = smul.u32 6, %s17
        $region56: #{_lambda_.1} parent=51 // pred_fallthru
          _
      $region52: #{_lambda_.1} parent=5 // pred_fallthru
        _
      %p322 = scmp.le.s32.totalorder 1, %s17
      %p323 = scmp.lt.s32.totalorder %s17, 3
      %p324 = pnand %p322, %p323
      %p325 = pneg %p324
      // Predicated region
      $region57: #{_lambda_.1} parent=5 // pred_check
        _
      $region58: #{_lambda_.1} parent=5 // pred_check_branch
        %327 = sbr.rel (%p324) target = $region60
      $region59: #{_lambda_.1} parent=5 // pred_region
        %s328 = ssub.s32 %s17, 1
        // Predicated region
        $region61: #{_lambda_.1} parent=59 // pred_check
          %p329 = pneg %p169
        $region62: #{_lambda_.1} parent=59 // pred_check_branch
          %331 = sbr.rel (%p329) target = $region64
        $region63: #{_lambda_.1} parent=59 // pred_region
          %333 = dma.done [#allocation3], 128
        $region64: #{_lambda_.1} parent=59 // pred_fallthru
          _
        %s334 = smul.u32 6, %s22
        %p335 = scmp.lt.s32.totalorder %s334, 11
        %s336 = scalar_select %p335, %s334, 11
        %s337 = smul.addr %s336, 8
        %s338 = scalar_lea.vmem %s0, %s337
        %p339 = pneg %p43
        %p340 = pneg %p40
        %p341 = pneg %p64
        %p342 = pneg %p61
        %p343 = pneg %p85
        %p344 = pneg %p82
        %p345 = pneg %p106
        %p346 = pneg %p103
        %p347 = pneg %p127
        %p348 = pneg %p124
        %p349 = pneg %p148
        %p350 = pneg %p145
        %p351 = pneg %p169
        %p352 = pneg %p166
        %p353 = pneg %p190
        %p354 = pneg %p187
        %p355 = pneg %p211
        %p356 = pneg %p208
        %p357 = pneg %p232
        %p358 = pneg %p229
        %p359 = pneg %p258
        %p360 = pneg %p255
        %s361 = smul.u32 6, %s22
        %p362 = scmp.lt.s32.totalorder %s361, 11
        %s363 = scalar_select %p362, %s361, 11
        %s364 = smul.addr %s363, 8
        %s365 = scalar_lea.vmem %s10, %s364
        %s366 = smul.u32 6, %s22
        %p367 = scmp.lt.s32.totalorder %s366, 11
        %s368 = scalar_select %p367, %s366, 11
        %s369 = smul.addr %s368, 8
        %s370 = scalar_lea.vmem %s0, %s369
        %s371 = smul.u32 6, %s22
        %s372 = smul.u32 6, %s22
        %p373 = scmp.lt.s32.totalorder %s372, 11
        %s374 = scalar_select %p373, %s372, 11
        %s375 = smul.addr %s374, 8
        %s376 = scalar_lea.vmem %s10, %s375
        %s377 = smul.u32 6, %s22
        %v378 = vld [vmem:[%s370] sm:$0xff]
        %v379 = vld [vmem:[%s370 + $0x8] sm:$0xff]
        %v380 = vld [vmem:[%s370 + $0x10] sm:$0xff]
        %v381 = vld [vmem:[%s370 + $0x18] sm:$0xff]
        %v382 = vld [vmem:[%s370 + $0x20] sm:$0xff]
        %v383 = vld [vmem:[%s370 + $0x28] sm:$0xff]
        %v384 = vld [vmem:[%s7] sm:$0xff]
        %v385 = vld [vmem:[%s7 + $0x8] sm:$0x1]
        %v386 = vld [vmem:[%s8] sm:$0xff]
        %v387 = vld [vmem:[%s8 + $0x8] sm:$0xff]
        %v388 = vld [vmem:[%s9] sm:$0xff]
        %v389 = vlaneseq
        %v390 = vshrl.u32 %v389, 7
        %v391 = vadd.s32 %v390, 8
        %v392 = vadd.s32 %v390, 16
        %v393 = vadd.s32 %v390, 24
        %v394 = vadd.s32 %v390, 32
        %v395 = vadd.s32 %v390, 40
        %v396 = vlaneseq
        %v397 = vand.u32 %v396, 127
        %v398 = vmul.u32 %v397, 16
        %vm399 = vcmp.ge.s32.totalorder %v390, %v398
        %vm400 = vcmp.ge.s32.totalorder %v391, %v398
        %vm401 = vcmp.ge.s32.totalorder %v392, %v398
        %vm402 = vcmp.ge.s32.totalorder %v393, %v398
        %vm403 = vcmp.ge.s32.totalorder %v394, %v398
        %vm404 = vcmp.ge.s32.totalorder %v395, %v398
        %v405 = vadd.s32 %v398, 16
        %vm406 = vcmp.lt.s32.totalorder %v390, %v405
        %vm407 = vcmp.lt.s32.totalorder %v391, %v405
        %vm408 = vcmp.lt.s32.totalorder %v392, %v405
        %vm409 = vcmp.lt.s32.totalorder %v393, %v405
        %vm410 = vcmp.lt.s32.totalorder %v394, %v405
        %vm411 = vcmp.lt.s32.totalorder %v395, %v405
        %vm412 = vmand %vm399, %vm406
        %vm413 = vmand %vm400, %vm407
        %vm414 = vmand %vm401, %vm408
        %vm415 = vmand %vm402, %vm409
        %vm416 = vmand %vm403, %vm410
        %vm417 = vmand %vm404, %vm411
        %v418 = vsel %vm412, 1, 0
        %v419 = vsel %vm413, 1, 0
        %v420 = vsel %vm414, 1, 0
        %v421 = vsel %vm415, 1, 0
        %v422 = vsel %vm416, 1, 0
        %v423 = vsel %vm417, 1, 0
        %v424 = vcvt.s32.f32 %v418
        %v425 = vcvt.s32.f32 %v419
        %v426 = vcvt.s32.f32 %v420
        %v427 = vcvt.s32.f32 %v421
        %v428 = vcvt.s32.f32 %v422
        %v429 = vcvt.s32.f32 %v423
        %vm430 = vcmp.eq.s32.totalorder %v390, %v398
        %vm431 = vcmp.eq.s32.totalorder %v391, %v398
        %vm432 = vcmp.eq.s32.totalorder %v392, %v398
        %vm433 = vcmp.eq.s32.totalorder %v393, %v398
        %vm434 = vcmp.eq.s32.totalorder %v394, %v398
        %vm435 = vcmp.eq.s32.totalorder %v395, %v398
        %v436 = vsel %vm430, 1, 0
        %v437 = vsel %vm431, 1, 0
        %v438 = vsel %vm432, 1, 0
        %v439 = vsel %vm433, 1, 0
        %v440 = vsel %vm434, 1, 0
        %v441 = vsel %vm435, 1, 0
        %v442 = vcvt.s32.f32 %v436
        %v443 = vcvt.s32.f32 %v437
        %v444 = vcvt.s32.f32 %v438
        %v445 = vcvt.s32.f32 %v439
        %v446 = vcvt.s32.f32 %v440
        %v447 = vcvt.s32.f32 %v441
        %vm448 = vcmask 23552
        %v449 = vsel %vm448, %v442, 0.0
        %450 = vadd.xlane.f32.xlu0 %v449
        %v451 = vpop.xlane.xlu0 %450
        %v452 = vsel %vm448, %v443, 0.0
        %453 = vadd.xlane.f32.xlu0 %v452
        %v454 = vpop.xlane.xlu0 %453
        %v455 = vsel %vm448, %v444, 0.0
        %456 = vadd.xlane.f32.xlu0 %v455
        %v457 = vpop.xlane.xlu0 %456
        %v458 = vsel %vm448, %v445, 0.0
        %459 = vadd.xlane.f32.xlu0 %v458
        %v460 = vpop.xlane.xlu0 %459
        %v461 = vsel %vm448, %v446, 0.0
        %462 = vadd.xlane.f32.xlu0 %v461
        %v463 = vpop.xlane.xlu0 %462
        %v464 = vsel %vm448, %v447, 0.0
        %465 = vadd.xlane.f32.xlu0 %v464
        %v466 = vpop.xlane.xlu0 %465
        %v467 = vsub.f32 1.0, %v451
        %v468 = vsub.f32 1.0, %v454
        %v469 = vsub.f32 1.0, %v457
        %v470 = vsub.f32 1.0, %v460
        %v471 = vsub.f32 1.0, %v463
        %v472 = vsub.f32 1.0, %v466
        %v473 = vadd.s32 %v398, 15
        %vm474 = vcmp.eq.s32.totalorder %v390, %v473
        %vm475 = vcmp.eq.s32.totalorder %v391, %v473
        %vm476 = vcmp.eq.s32.totalorder %v392, %v473
        %vm477 = vcmp.eq.s32.totalorder %v393, %v473
        %vm478 = vcmp.eq.s32.totalorder %v394, %v473
        %vm479 = vcmp.eq.s32.totalorder %v395, %v473
        %v480 = vsel %vm474, 1, 0
        %v481 = vsel %vm475, 1, 0
        %v482 = vsel %vm476, 1, 0
        %v483 = vsel %vm477, 1, 0
        %v484 = vsel %vm478, 1, 0
        %v485 = vsel %vm479, 1, 0
        %v486 = vcvt.s32.f32 %v480
        %v487 = vcvt.s32.f32 %v481
        %v488 = vcvt.s32.f32 %v482
        %v489 = vcvt.s32.f32 %v483
        %v490 = vcvt.s32.f32 %v484
        %v491 = vcvt.s32.f32 %v485
        %v492 = vsel %vm448, %v486, 0.0
        %493 = vadd.xlane.f32.xlu0 %v492
        %v494 = vpop.xlane.xlu0 %493
        %v495 = vsel %vm448, %v487, 0.0
        %496 = vadd.xlane.f32.xlu0 %v495
        %v497 = vpop.xlane.xlu0 %496
        %v498 = vsel %vm448, %v488, 0.0
        %499 = vadd.xlane.f32.xlu0 %v498
        %v500 = vpop.xlane.xlu0 %499
        %v501 = vsel %vm448, %v489, 0.0
        %502 = vadd.xlane.f32.xlu0 %v501
        %v503 = vpop.xlane.xlu0 %502
        %v504 = vsel %vm448, %v490, 0.0
        %505 = vadd.xlane.f32.xlu0 %v504
        %v506 = vpop.xlane.xlu0 %505
        %v507 = vsel %vm448, %v491, 0.0
        %508 = vadd.xlane.f32.xlu0 %v507
        %v509 = vpop.xlane.xlu0 %508
        %v510 = vsub.f32 1.0, %v494
        %v511 = vsub.f32 1.0, %v497
        %v512 = vsub.f32 1.0, %v500
        %v513 = vsub.f32 1.0, %v503
        %v514 = vsub.f32 1.0, %v506
        %v515 = vsub.f32 1.0, %v509
        %v516 = vmul.u32 %v390, 16
        %vm517 = vcmp.ge.s32.totalorder %v397, %v516
        %v518 = vadd.s32 %v516, 16
        %vm519 = vcmp.lt.s32.totalorder %v397, %v518
        %vm520 = vmand %vm517, %vm519
        %v521 = vsel %vm520, 1, 0
        %v522 = vcvt.s32.f32 %v521
        %v523 = vld [vmem:[%s2] sm:$0xff]
        %v524 = vld [vmem:[%s2 + $0x8] sm:$0xff]
        %v525 = vld [vmem:[%s2 + $0x10] sm:$0xff]
        %v526 = vrot.slane %v378, 7
        %v527 = vrot.slane %v379, 7
        %v528 = vrot.slane %v380, 7
        %v529 = vrot.slane %v381, 7
        %v530 = vrot.slane %v382, 7
        %v531 = vrot.slane %v383, 7
        %vm532 = vcmp.lt.s32.totalorder %v390, 1
        %v533 = vsel %vm532, %v530, %v531
        %v534 = vsel %vm532, %v529, %v530
        %v535 = vsel %vm532, %v528, %v529
        %v536 = vsel %vm532, %v527, %v528
        %v537 = vsel %vm532, %v526, %v527
        %v538 = vsel %vm532, %v531, %v526
        %v539 = vmul.f32 %v538, %v467
        %v540 = vmul.f32 %v537, %v468
        %v541 = vmul.f32 %v536, %v469
        %v542 = vmul.f32 %v535, %v470
        %v543 = vmul.f32 %v534, %v471
        %v544 = vmul.f32 %v533, %v472
        %v545 = vrot.slane %v378, 1
        %v546 = vrot.slane %v379, 1
        %v547 = vrot.slane %v380, 1
        %v548 = vrot.slane %v381, 1
        %v549 = vrot.slane %v382, 1
        %v550 = vrot.slane %v383, 1
        %vm551 = vcmp.lt.s32.totalorder %v390, 7
        %v552 = vsel %vm551, %v549, %v550
        %v553 = vsel %vm551, %v548, %v549
        %v554 = vsel %vm551, %v547, %v548
        %v555 = vsel %vm551, %v546, %v547
        %v556 = vsel %vm551, %v545, %v546
        %v557 = vsel %vm551, %v550, %v545
        %v558 = vmul.f32 %v556, %v510
        %v559 = vmul.f32 %v555, %v511
        %v560 = vmul.f32 %v554, %v512
        %v561 = vmul.f32 %v553, %v513
        %v562 = vmul.f32 %v552, %v514
        %v563 = vmul.f32 %v557, %v515
        %vm564 = vcmask 64512
        %v566 = vsel %vm564, %v378, 0
        %v569 = vsel %vm564, %v379, 0
        %v572 = vsel %vm564, %v380, 0
        %v575 = vsel %vm564, %v381, 0
        %v578 = vsel %vm564, %v382, 0
        %v581 = vsel %vm564, %v383, 0
        %583 = vmatpush.msra.mxu0 0.0
        %584 = vmatpush.msra.mxu0 0.0
        %585 = vmatpush.msra.mxu0 0.0
        %586 = vmatpush.msra.mxu0 0.0
        %587 = vmatpush.msra.mxu0 0.0
        %588 = vmatpush.msra.mxu0 0.0
        %589 = vmatpush.msra.mxu0 0.0
        %590 = vmatpush.msra.mxu0 0.0
        %591 = vmatpush.msra.mxu0 0.0
        %592 = vmatpush.msra.mxu0 0.0
        %593 = vmatpush.msra.mxu0 0.0
        %594 = vmatpush.msra.mxu0 0.0
        %595 = vmatpush.msra.mxu0 0.0
        %596 = vmatpush.msra.mxu0 0.0
        %597 = vmatpush.msra.mxu0 0.0
        %598 = vmatpush.msra.mxu0 %v524
        %599 = vmatmul.f32.gmra.mxu0 %v566
        %v600 = vpop.f32.mrf.mxu0
        %v601 = vadd.f32 0.0, %v600
        %602 = vmatmul.f32.gmra.mxu0 %v569
        %v603 = vpop.f32.mrf.mxu0
        %v604 = vadd.f32 0.0, %v603
        %605 = vmatmul.f32.gmra.mxu0 %v572
        %v606 = vpop.f32.mrf.mxu0
        %v607 = vadd.f32 0.0, %v606
        %608 = vmatmul.f32.gmra.mxu0 %v575
        %v609 = vpop.f32.mrf.mxu0
        %v610 = vadd.f32 0.0, %v609
        %611 = vmatmul.f32.gmra.mxu0 %v578
        %v612 = vpop.f32.mrf.mxu0
        %v613 = vadd.f32 0.0, %v612
        %614 = vmatmul.f32.gmra.mxu0 %v581
        %v615 = vpop.f32.mrf.mxu0
        %v616 = vadd.f32 0.0, %v615
        %617 = vdwg.mxu0
        %v619 = vsel %vm564, %v539, 0
        %v622 = vsel %vm564, %v540, 0
        %v625 = vsel %vm564, %v541, 0
        %v628 = vsel %vm564, %v542, 0
        %v631 = vsel %vm564, %v543, 0
        %v634 = vsel %vm564, %v544, 0
        %636 = vmatpush.msra.mxu0 0.0
        %637 = vmatpush.msra.mxu0 0.0
        %638 = vmatpush.msra.mxu0 0.0
        %639 = vmatpush.msra.mxu0 0.0
        %640 = vmatpush.msra.mxu0 0.0
        %641 = vmatpush.msra.mxu0 0.0
        %642 = vmatpush.msra.mxu0 0.0
        %643 = vmatpush.msra.mxu0 0.0
        %644 = vmatpush.msra.mxu0 0.0
        %645 = vmatpush.msra.mxu0 0.0
        %646 = vmatpush.msra.mxu0 0.0
        %647 = vmatpush.msra.mxu0 0.0
        %648 = vmatpush.msra.mxu0 0.0
        %649 = vmatpush.msra.mxu0 0.0
        %650 = vmatpush.msra.mxu0 0.0
        %651 = vmatpush.msra.mxu0 %v523
        %652 = vmatmul.f32.gmra.mxu0 %v619
        %v653 = vpop.f32.mrf.mxu0
        %v654 = vadd.f32 %v601, %v653
        %655 = vmatmul.f32.gmra.mxu0 %v622
        %v656 = vpop.f32.mrf.mxu0
        %v657 = vadd.f32 %v604, %v656
        %658 = vmatmul.f32.gmra.mxu0 %v625
        %v659 = vpop.f32.mrf.mxu0
        %v660 = vadd.f32 %v607, %v659
        %661 = vmatmul.f32.gmra.mxu0 %v628
        %v662 = vpop.f32.mrf.mxu0
        %v663 = vadd.f32 %v610, %v662
        %664 = vmatmul.f32.gmra.mxu0 %v631
        %v665 = vpop.f32.mrf.mxu0
        %v666 = vadd.f32 %v613, %v665
        %667 = vmatmul.f32.gmra.mxu0 %v634
        %v668 = vpop.f32.mrf.mxu0
        %v669 = vadd.f32 %v616, %v668
        %670 = vdwg.mxu0
        %v672 = vsel %vm564, %v558, 0
        %v675 = vsel %vm564, %v559, 0
        %v678 = vsel %vm564, %v560, 0
        %v681 = vsel %vm564, %v561, 0
        %v684 = vsel %vm564, %v562, 0
        %v687 = vsel %vm564, %v563, 0
        %689 = vmatpush.msra.mxu0 0.0
        %690 = vmatpush.msra.mxu0 0.0
        %691 = vmatpush.msra.mxu0 0.0
        %692 = vmatpush.msra.mxu0 0.0
        %693 = vmatpush.msra.mxu0 0.0
        %694 = vmatpush.msra.mxu0 0.0
        %695 = vmatpush.msra.mxu0 0.0
        %696 = vmatpush.msra.mxu0 0.0
        %697 = vmatpush.msra.mxu0 0.0
        %698 = vmatpush.msra.mxu0 0.0
        %699 = vmatpush.msra.mxu0 0.0
        %700 = vmatpush.msra.mxu0 0.0
        %701 = vmatpush.msra.mxu0 0.0
        %702 = vmatpush.msra.mxu0 0.0
        %703 = vmatpush.msra.mxu0 0.0
        %704 = vmatpush.msra.mxu0 %v525
        %705 = vmatmul.f32.gmra.mxu0 %v672
        %v706 = vpop.f32.mrf.mxu0
        %v707 = vadd.f32 0.0, %v706
        %708 = vmatmul.f32.gmra.mxu0 %v675
        %v709 = vpop.f32.mrf.mxu0
        %v710 = vadd.f32 0.0, %v709
        %711 = vmatmul.f32.gmra.mxu0 %v678
        %v712 = vpop.f32.mrf.mxu0
        %v713 = vadd.f32 0.0, %v712
        %714 = vmatmul.f32.gmra.mxu0 %v681
        %v715 = vpop.f32.mrf.mxu0
        %v716 = vadd.f32 0.0, %v715
        %717 = vmatmul.f32.gmra.mxu0 %v684
        %v718 = vpop.f32.mrf.mxu0
        %v719 = vadd.f32 0.0, %v718
        %720 = vmatmul.f32.gmra.mxu0 %v687
        %v721 = vpop.f32.mrf.mxu0
        %v722 = vadd.f32 0.0, %v721
        %723 = vdwg.mxu0
        %v724 = vadd.f32 %v654, %v707
        %v725 = vadd.f32 %v657, %v710
        %v726 = vadd.f32 %v660, %v713
        %v727 = vadd.f32 %v663, %v716
        %v728 = vadd.f32 %v666, %v719
        %v729 = vadd.f32 %v669, %v722
        %v730 = vperm.slane %v384, 0
        %v731 = vadd.f32 %v724, %v730
        %v732 = vadd.f32 %v725, %v730
        %v733 = vadd.f32 %v726, %v730
        %v734 = vadd.f32 %v727, %v730
        %v735 = vadd.f32 %v728, %v730
        %v736 = vadd.f32 %v729, %v730
        %vm737 = vcmask 392192
        %v739 = vsel %vm737, %v522, 0
        %741 = vmatpush.msra.mxu0 0.0
        %742 = vmatpush.msra.mxu0 0.0
        %743 = vmatpush.msra.mxu0 0.0
        %744 = vmatpush.msra.mxu0 0.0
        %745 = vmatpush.msra.mxu0 0.0
        %746 = vmatpush.msra.mxu0 0.0
        %747 = vmatpush.msra.mxu0 0.0
        %748 = vmatpush.msra.mxu0 0.0
        %749 = vmatpush.msra.mxu0 0.0
        %750 = vmatpush.msra.mxu0 0.0
        %751 = vmatpush.msra.mxu0 %v736
        %752 = vmatpush.msra.mxu0 %v735
        %753 = vmatpush.msra.mxu0 %v734
        %754 = vmatpush.msra.mxu0 %v733
        %755 = vmatpush.msra.mxu0 %v732
        %756 = vmatpush.msra.mxu0 %v731
        %757 = vmatmul.f32.gmra.mxu0 %v739
        %v758 = vpop.f32.mrf.mxu0
        %v759 = vadd.f32 0.0, %v758
        %760 = vdwg.mxu0
        %v761 = vmul.f32 %v731, %v731
        %v762 = vmul.f32 %v732, %v732
        %v763 = vmul.f32 %v733, %v733
        %v764 = vmul.f32 %v734, %v734
        %v765 = vmul.f32 %v735, %v735
        %v766 = vmul.f32 %v736, %v736
        %767 = vmatpush.msra.mxu0 0.0
        %768 = vmatpush.msra.mxu0 0.0
        %769 = vmatpush.msra.mxu0 0.0
        %770 = vmatpush.msra.mxu0 0.0
        %771 = vmatpush.msra.mxu0 0.0
        %772 = vmatpush.msra.mxu0 0.0
        %773 = vmatpush.msra.mxu0 0.0
        %774 = vmatpush.msra.mxu0 0.0
        %775 = vmatpush.msra.mxu0 0.0
        %776 = vmatpush.msra.mxu0 0.0
        %777 = vmatpush.msra.mxu0 %v766
        %778 = vmatpush.msra.mxu0 %v765
        %779 = vmatpush.msra.mxu0 %v764
        %780 = vmatpush.msra.mxu0 %v763
        %781 = vmatpush.msra.mxu0 %v762
        %782 = vmatpush.msra.mxu0 %v761
        %783 = vmatmul.f32.gmra.mxu0 %v739
        %v784 = vpop.f32.mrf.mxu0
        %v785 = vadd.f32 0.0, %v784
        %786 = vdwg.mxu0
        %vm787 = vcmask 130048
        %v789 = vsel %vm787, %v759, 0
        %791 = vmatpush.msra.mxu0 0.0
        %792 = vmatpush.msra.mxu0 0.0
        %793 = vmatpush.msra.mxu0 0.0
        %794 = vmatpush.msra.mxu0 0.0
        %795 = vmatpush.msra.mxu0 0.0
        %796 = vmatpush.msra.mxu0 0.0
        %797 = vmatpush.msra.mxu0 0.0
        %798 = vmatpush.msra.mxu0 0.0
        %799 = vmatpush.msra.mxu0 0.0
        %800 = vmatpush.msra.mxu0 0.0
        %801 = vmatpush.msra.mxu0 0.0
        %802 = vmatpush.msra.mxu0 0.0
        %803 = vmatpush.msra.mxu0 0.0
        %804 = vmatpush.msra.mxu0 0.0
        %805 = vmatpush.msra.mxu0 %v387
        %806 = vmatpush.msra.mxu0 %v386
        %807 = vmatmul.f32.gmra.mxu0 %v789
        %v808 = vpop.f32.mrf.mxu0
        %v809 = vadd.f32 0.0, %v808
        %810 = vdwg.mxu0
        %v812 = vsel %vm787, %v785, 0
        %814 = vmatpush.msra.mxu0 0.0
        %815 = vmatpush.msra.mxu0 0.0
        %816 = vmatpush.msra.mxu0 0.0
        %817 = vmatpush.msra.mxu0 0.0
        %818 = vmatpush.msra.mxu0 0.0
        %819 = vmatpush.msra.mxu0 0.0
        %820 = vmatpush.msra.mxu0 0.0
        %821 = vmatpush.msra.mxu0 0.0
        %822 = vmatpush.msra.mxu0 0.0
        %823 = vmatpush.msra.mxu0 0.0
        %824 = vmatpush.msra.mxu0 0.0
        %825 = vmatpush.msra.mxu0 0.0
        %826 = vmatpush.msra.mxu0 0.0
        %827 = vmatpush.msra.mxu0 0.0
        %828 = vmatpush.msra.mxu0 %v387
        %829 = vmatpush.msra.mxu0 %v386
        %830 = vmatmul.f32.gmra.mxu0 %v812
        %v831 = vpop.f32.mrf.mxu0
        %v832 = vadd.f32 0.0, %v831
        %833 = vdwg.mxu0
        %v834 = vmul.f32 %v809, %v809
        %v835 = vsub.f32 %v832, %v834
        %v836 = vadd.f32 %v835, 1e-05
        %v837 = vrsqrt.pop %v836
        %v838 = vmul.f32 %v837, %v836
        %v839 = vmul.f32 %v838, %v837
        %v840 = vmul.f32 0.5, %v839
        %v841 = vsub.f32 1.5, %v840
        %v842 = vmul.f32 %v837, %v841
        %vm843 = vweird.f32 %v836
        %vm844 = vweird.f32 %v837
        %vm845 = vmor %vm843, %vm844
        %v846 = vsel %vm845, %v837, %v842
        %v848 = vsel %vm564, %v809, 0
        %850 = vmatpush.msra.mxu0 0.0
        %851 = vmatpush.msra.mxu0 0.0
        %852 = vmatpush.msra.mxu0 0.0
        %853 = vmatpush.msra.mxu0 0.0
        %854 = vmatpush.msra.mxu0 0.0
        %855 = vmatpush.msra.mxu0 0.0
        %856 = vmatpush.msra.mxu0 0.0
        %857 = vmatpush.msra.mxu0 0.0
        %858 = vmatpush.msra.mxu0 0.0
        %859 = vmatpush.msra.mxu0 0.0
        %860 = vmatpush.msra.mxu0 0.0
        %861 = vmatpush.msra.mxu0 0.0
        %862 = vmatpush.msra.mxu0 0.0
        %863 = vmatpush.msra.mxu0 0.0
        %864 = vmatpush.msra.mxu0 0.0
        %865 = vmatpush.msra.mxu0 %v388
        %866 = vmatmul.f32.gmra.mxu0 %v848
        %v867 = vpop.f32.mrf.mxu0
        %v868 = vadd.f32 0.0, %v867
        %869 = vdwg.mxu0
        %v871 = vsel %vm564, %v846, 0
        %873 = vmatpush.msra.mxu0 0.0
        %874 = vmatpush.msra.mxu0 0.0
        %875 = vmatpush.msra.mxu0 0.0
        %876 = vmatpush.msra.mxu0 0.0
        %877 = vmatpush.msra.mxu0 0.0
        %878 = vmatpush.msra.mxu0 0.0
        %879 = vmatpush.msra.mxu0 0.0
        %880 = vmatpush.msra.mxu0 0.0
        %881 = vmatpush.msra.mxu0 0.0
        %882 = vmatpush.msra.mxu0 0.0
        %883 = vmatpush.msra.mxu0 0.0
        %884 = vmatpush.msra.mxu0 0.0
        %885 = vmatpush.msra.mxu0 0.0
        %886 = vmatpush.msra.mxu0 0.0
        %887 = vmatpush.msra.mxu0 0.0
        %888 = vmatpush.msra.mxu0 %v388
        %889 = vmatmul.f32.gmra.mxu0 %v871
        %v890 = vpop.f32.mrf.mxu0
        %v891 = vadd.f32 0.0, %v890
        %892 = vdwg.mxu0
        %v894 = vsel %vm448, %v424, 0
        %v897 = vsel %vm448, %v425, 0
        %v900 = vsel %vm448, %v426, 0
        %v903 = vsel %vm448, %v427, 0
        %v906 = vsel %vm448, %v428, 0
        %v909 = vsel %vm448, %v429, 0
        %vm911 = vcmask 1042432
        %v913 = vsel %vm911, %v868, 0
        %915 = vmatpush.msra.mxu0 0.0
        %916 = vmatpush.msra.mxu0 0.0
        %917 = vmatpush.msra.mxu0 0.0
        %918 = vmatpush.msra.mxu0 0.0
        %919 = vmatpush.msra.mxu0 0.0
        %920 = vmatpush.msra.mxu0 0.0
        %921 = vmatpush.msra.mxu0 0.0
        %922 = vmatpush.msra.mxu0 0.0
        %923 = vmatpush.msra.mxu0 0.0
        %924 = vmatpush.msra.mxu0 0.0
        %925 = vmatpush.msra.mxu0 0.0
        %926 = vmatpush.msra.mxu0 0.0
        %927 = vmatpush.msra.mxu0 0.0
        %928 = vmatpush.msra.mxu0 0.0
        %929 = vmatpush.msra.mxu0 0.0
        %930 = vmatpush.msra.mxu0 %v913
        %931 = vmatmul.f32.gmra.mxu0 %v894
        %v932 = vpop.f32.mrf.mxu0
        %v933 = vadd.f32 0.0, %v932
        %934 = vmatmul.f32.gmra.mxu0 %v897
        %v935 = vpop.f32.mrf.mxu0
        %v936 = vadd.f32 0.0, %v935
        %937 = vmatmul.f32.gmra.mxu0 %v900
        %v938 = vpop.f32.mrf.mxu0
        %v939 = vadd.f32 0.0, %v938
        %940 = vmatmul.f32.gmra.mxu0 %v903
        %v941 = vpop.f32.mrf.mxu0
        %v942 = vadd.f32 0.0, %v941
        %943 = vmatmul.f32.gmra.mxu0 %v906
        %v944 = vpop.f32.mrf.mxu0
        %v945 = vadd.f32 0.0, %v944
        %946 = vmatmul.f32.gmra.mxu0 %v909
        %v947 = vpop.f32.mrf.mxu0
        %v948 = vadd.f32 0.0, %v947
        %949 = vdwg.mxu0
        %v951 = vsel %vm911, %v891, 0
        %953 = vmatpush.msra.mxu0 0.0
        %954 = vmatpush.msra.mxu0 0.0
        %955 = vmatpush.msra.mxu0 0.0
        %956 = vmatpush.msra.mxu0 0.0
        %957 = vmatpush.msra.mxu0 0.0
        %958 = vmatpush.msra.mxu0 0.0
        %959 = vmatpush.msra.mxu0 0.0
        %960 = vmatpush.msra.mxu0 0.0
        %961 = vmatpush.msra.mxu0 0.0
        %962 = vmatpush.msra.mxu0 0.0
        %963 = vmatpush.msra.mxu0 0.0
        %964 = vmatpush.msra.mxu0 0.0
        %965 = vmatpush.msra.mxu0 0.0
        %966 = vmatpush.msra.mxu0 0.0
        %967 = vmatpush.msra.mxu0 0.0
        %968 = vmatpush.msra.mxu0 %v951
        %969 = vmatmul.f32.gmra.mxu0 %v894
        %v970 = vpop.f32.mrf.mxu0
        %v971 = vadd.f32 0.0, %v970
        %972 = vmatmul.f32.gmra.mxu0 %v897
        %v973 = vpop.f32.mrf.mxu0
        %v974 = vadd.f32 0.0, %v973
        %975 = vmatmul.f32.gmra.mxu0 %v900
        %v976 = vpop.f32.mrf.mxu0
        %v977 = vadd.f32 0.0, %v976
        %978 = vmatmul.f32.gmra.mxu0 %v903
        %v979 = vpop.f32.mrf.mxu0
        %v980 = vadd.f32 0.0, %v979
        %981 = vmatmul.f32.gmra.mxu0 %v906
        %v982 = vpop.f32.mrf.mxu0
        %v983 = vadd.f32 0.0, %v982
        %984 = vmatmul.f32.gmra.mxu0 %v909
        %v985 = vpop.f32.mrf.mxu0
        %v986 = vadd.f32 0.0, %v985
        %987 = vdwg.mxu0
        %v988 = vsub.f32 %v731, %v933
        %v989 = vsub.f32 %v732, %v936
        %v990 = vsub.f32 %v733, %v939
        %v991 = vsub.f32 %v734, %v942
        %v992 = vsub.f32 %v735, %v945
        %v993 = vsub.f32 %v736, %v948
        %v994 = vmul.f32 %v988, %v971
        %v995 = vmul.f32 %v989, %v974
        %v996 = vmul.f32 %v990, %v977
        %v997 = vmul.f32 %v991, %v980
        %v998 = vmul.f32 %v992, %v983
        %v999 = vmul.f32 %v993, %v986
        %v1000 = vperm.slane %v384, 1
        %v1001 = vmul.f32 %v994, %v1000
        %v1002 = vmul.f32 %v995, %v1000
        %v1003 = vmul.f32 %v996, %v1000
        %v1004 = vmul.f32 %v997, %v1000
        %v1005 = vmul.f32 %v998, %v1000
        %v1006 = vmul.f32 %v999, %v1000
        %v1007 = vperm.slane %v384, 2
        %v1008 = vadd.f32 %v1001, %v1007
        %v1009 = vadd.f32 %v1002, %v1007
        %v1010 = vadd.f32 %v1003, %v1007
        %v1011 = vadd.f32 %v1004, %v1007
        %v1012 = vadd.f32 %v1005, %v1007
        %v1013 = vadd.f32 %v1006, %v1007
        %v1014 = vmax.f32 %v1008, 0.0
        %v1015 = vmax.f32 %v1009, 0.0
        %v1016 = vmax.f32 %v1010, 0.0
        %v1017 = vmax.f32 %v1011, 0.0
        %v1018 = vmax.f32 %v1012, 0.0
        %v1019 = vmax.f32 %v1013, 0.0
        %v1020 = vand.u32 2147483647, %v1008
        %v1021 = vand.u32 2147483647, %v1009
        %v1022 = vand.u32 2147483647, %v1010
        %v1023 = vand.u32 2147483647, %v1011
        %v1024 = vand.u32 2147483647, %v1012
        %v1025 = vand.u32 2147483647, %v1013
        %v1026 = vsub.f32 0.0, %v1020
        %v1027 = vsub.f32 0.0, %v1021
        %v1028 = vsub.f32 0.0, %v1022
        %v1029 = vsub.f32 0.0, %v1023
        %v1030 = vsub.f32 0.0, %v1024
        %v1031 = vsub.f32 0.0, %v1025
        %v1032 = vmul.f32 %v1026, 1.442695
        %v1033 = vpow.pop %v1032
        %v1034 = vmul.f32 %v1027, 1.442695
        %v1035 = vpow.pop %v1034
        %v1036 = vmul.f32 %v1028, 1.442695
        %v1037 = vpow.pop %v1036
        %v1038 = vmul.f32 %v1029, 1.442695
        %v1039 = vpow.pop %v1038
        %v1040 = vmul.f32 %v1030, 1.442695
        %v1041 = vpow.pop %v1040
        %v1042 = vmul.f32 %v1031, 1.442695
        %v1043 = vpow.pop %v1042
        %v1044 = vadd.f32 %v1033, 1.0
        %v1045 = vadd.f32 %v1035, 1.0
        %v1046 = vadd.f32 %v1037, 1.0
        %v1047 = vadd.f32 %v1039, 1.0
        %v1048 = vadd.f32 %v1041, 1.0
        %v1049 = vadd.f32 %v1043, 1.0
        %v1050 = vlog2.pop %v1044
        %v1051 = vmul.f32 %v1050, 0.6931472
        %v1052 = vlog2.pop %v1045
        %v1053 = vmul.f32 %v1052, 0.6931472
        %v1054 = vlog2.pop %v1046
        %v1055 = vmul.f32 %v1054, 0.6931472
        %v1056 = vlog2.pop %v1047
        %v1057 = vmul.f32 %v1056, 0.6931472
        %v1058 = vlog2.pop %v1048
        %v1059 = vmul.f32 %v1058, 0.6931472
        %v1060 = vlog2.pop %v1049
        %v1061 = vmul.f32 %v1060, 0.6931472
        %v1062 = vadd.f32 %v1014, %v1051
        %v1063 = vadd.f32 %v1015, %v1053
        %v1064 = vadd.f32 %v1016, %v1055
        %v1065 = vadd.f32 %v1017, %v1057
        %v1066 = vadd.f32 %v1018, %v1059
        %v1067 = vadd.f32 %v1019, %v1061
        %v1068 = vtanh.pop %v1062
        %v1069 = vtanh.pop %v1063
        %v1070 = vtanh.pop %v1064
        %v1071 = vtanh.pop %v1065
        %v1072 = vtanh.pop %v1066
        %v1073 = vtanh.pop %v1067
        %v1074 = vmul.f32 %v1008, %v1068
        %v1075 = vmul.f32 %v1009, %v1069
        %v1076 = vmul.f32 %v1010, %v1070
        %v1077 = vmul.f32 %v1011, %v1071
        %v1078 = vmul.f32 %v1012, %v1072
        %v1079 = vmul.f32 %v1013, %v1073
        %s1080 = smul.u32 %s22, 3
        %v1081 = vstv %s1080
        %v1082 = vadd.s32 %v390, %v1081
        %vm1083 = vcmp.eq.s32.totalorder %v397, %v1082
        %v1084 = vsel %vm1083, 1, 0
        %v1085 = vcvt.s32.f32 %v1084
        %v1086 = vld [vmem:[%s1] sm:$0x3f]
        %vm1087 = vcmask 48128
        %v1089 = vsel %vm1087, %v1085, 0
        %vm1091 = vcmask 1045504
        %v1093 = vsel %vm1091, %v1086, 0
        %1095 = vmatpush.msra.mxu0 0.0
        %1096 = vmatpush.msra.mxu0 0.0
        %1097 = vmatpush.msra.mxu0 0.0
        %1098 = vmatpush.msra.mxu0 0.0
        %1099 = vmatpush.msra.mxu0 0.0
        %1100 = vmatpush.msra.mxu0 0.0
        %1101 = vmatpush.msra.mxu0 0.0
        %1102 = vmatpush.msra.mxu0 0.0
        %1103 = vmatpush.msra.mxu0 0.0
        %1104 = vmatpush.msra.mxu0 0.0
        %1105 = vmatpush.msra.mxu0 0.0
        %1106 = vmatpush.msra.mxu0 0.0
        %1107 = vmatpush.msra.mxu0 0.0
        %1108 = vmatpush.msra.mxu0 0.0
        %1109 = vmatpush.msra.mxu0 0.0
        %1110 = vmatpush.msra.mxu0 %v1093
        %1111 = vmatmul.f32.gmra.mxu0 %v1089
        %v1112 = vpop.f32.mrf.mxu0
        %v1113 = vadd.f32 0.0, %v1112
        %1114 = vdwg.mxu0
        %v1115 = vmax.f32 %v1113, 0.0
        %v1116 = vand.u32 2147483647, %v1113
        %v1117 = vsub.f32 0.0, %v1116
        %v1118 = vmul.f32 %v1117, 1.442695
        %v1119 = vpow.pop %v1118
        %v1120 = vadd.f32 %v1119, 1.0
        %v1121 = vlog2.pop %v1120
        %v1122 = vmul.f32 %v1121, 0.6931472
        %v1123 = vadd.f32 %v1115, %v1122
        %v1124 = vtanh.pop %v1123
        %v1125 = vmul.f32 %v1113, %v1124
        %v1126 = vld [vmem:[%s3] sm:$0xff]
        %v1127 = vld [vmem:[%s3 + $0x8] sm:$0xf]
        %v1128 = vperm.slane %v384, 3
        %vm1129 = vcmask 97280
        %v1131 = vsel %vm1129, %v1125, 0
        %vm1133 = vcmask 1043456
        %v1135 = vsel %vm1133, %v1127, 0
        %1137 = vmatpush.msra.mxu0 0.0
        %1138 = vmatpush.msra.mxu0 0.0
        %1139 = vmatpush.msra.mxu0 0.0
        %1140 = vmatpush.msra.mxu0 0.0
        %1141 = vmatpush.msra.mxu0 0.0
        %1142 = vmatpush.msra.mxu0 0.0
        %1143 = vmatpush.msra.mxu0 0.0
        %1144 = vmatpush.msra.mxu0 0.0
        %1145 = vmatpush.msra.mxu0 0.0
        %1146 = vmatpush.msra.mxu0 0.0
        %1147 = vmatpush.msra.mxu0 0.0
        %1148 = vmatpush.msra.mxu0 0.0
        %1149 = vmatpush.msra.mxu0 0.0
        %1150 = vmatpush.msra.mxu0 0.0
        %1151 = vmatpush.msra.mxu0 %v1135
        %1152 = vmatpush.msra.mxu0 %v1126
        %1153 = vmatmul.f32.gmra.mxu0 %v1131
        %v1154 = vpop.f32.mrf.mxu0
        %v1155 = vadd.f32 %v1128, %v1154
        %1156 = vdwg.mxu0
        %v1157 = vld [vmem:[%s4] sm:$0xff]
        %v1158 = vld [vmem:[%s4 + $0x8] sm:$0xf]
        %v1159 = vperm.slane %v384, 4
        %v1161 = vsel %vm1133, %v1158, 0
        %1163 = vmatpush.msra.mxu0 0.0
        %1164 = vmatpush.msra.mxu0 0.0
        %1165 = vmatpush.msra.mxu0 0.0
        %1166 = vmatpush.msra.mxu0 0.0
        %1167 = vmatpush.msra.mxu0 0.0
        %1168 = vmatpush.msra.mxu0 0.0
        %1169 = vmatpush.msra.mxu0 0.0
        %1170 = vmatpush.msra.mxu0 0.0
        %1171 = vmatpush.msra.mxu0 0.0
        %1172 = vmatpush.msra.mxu0 0.0
        %1173 = vmatpush.msra.mxu0 0.0
        %1174 = vmatpush.msra.mxu0 0.0
        %1175 = vmatpush.msra.mxu0 0.0
        %1176 = vmatpush.msra.mxu0 0.0
        %1177 = vmatpush.msra.mxu0 %v1161
        %1178 = vmatpush.msra.mxu0 %v1157
        %1179 = vmatmul.f32.gmra.mxu0 %v1131
        %v1180 = vpop.f32.mrf.mxu0
        %v1181 = vadd.f32 %v1159, %v1180
        %1182 = vdwg.mxu0
        %v1184 = vsel %vm911, %v1155, 0
        %1186 = vmatpush.msra.mxu0 0.0
        %1187 = vmatpush.msra.mxu0 0.0
        %1188 = vmatpush.msra.mxu0 0.0
        %1189 = vmatpush.msra.mxu0 0.0
        %1190 = vmatpush.msra.mxu0 0.0
        %1191 = vmatpush.msra.mxu0 0.0
        %1192 = vmatpush.msra.mxu0 0.0
        %1193 = vmatpush.msra.mxu0 0.0
        %1194 = vmatpush.msra.mxu0 0.0
        %1195 = vmatpush.msra.mxu0 0.0
        %1196 = vmatpush.msra.mxu0 0.0
        %1197 = vmatpush.msra.mxu0 0.0
        %1198 = vmatpush.msra.mxu0 0.0
        %1199 = vmatpush.msra.mxu0 0.0
        %1200 = vmatpush.msra.mxu0 0.0
        %1201 = vmatpush.msra.mxu0 %v1184
        %1202 = vmatmul.f32.gmra.mxu0 %v894
        %v1203 = vpop.f32.mrf.mxu0
        %v1204 = vadd.f32 0.0, %v1203
        %1205 = vmatmul.f32.gmra.mxu0 %v897
        %v1206 = vpop.f32.mrf.mxu0
        %v1207 = vadd.f32 0.0, %v1206
        %1208 = vmatmul.f32.gmra.mxu0 %v900
        %v1209 = vpop.f32.mrf.mxu0
        %v1210 = vadd.f32 0.0, %v1209
        %1211 = vmatmul.f32.gmra.mxu0 %v903
        %v1212 = vpop.f32.mrf.mxu0
        %v1213 = vadd.f32 0.0, %v1212
        %1214 = vmatmul.f32.gmra.mxu0 %v906
        %v1215 = vpop.f32.mrf.mxu0
        %v1216 = vadd.f32 0.0, %v1215
        %1217 = vmatmul.f32.gmra.mxu0 %v909
        %v1218 = vpop.f32.mrf.mxu0
        %v1219 = vadd.f32 0.0, %v1218
        %1220 = vdwg.mxu0
        %v1221 = vmul.f32 %v1204, %v1074
        %v1222 = vmul.f32 %v1207, %v1075
        %v1223 = vmul.f32 %v1210, %v1076
        %v1224 = vmul.f32 %v1213, %v1077
        %v1225 = vmul.f32 %v1216, %v1078
        %v1226 = vmul.f32 %v1219, %v1079
        %v1228 = vsel %vm911, %v1181, 0
        %1230 = vmatpush.msra.mxu0 0.0
        %1231 = vmatpush.msra.mxu0 0.0
        %1232 = vmatpush.msra.mxu0 0.0
        %1233 = vmatpush.msra.mxu0 0.0
        %1234 = vmatpush.msra.mxu0 0.0
        %1235 = vmatpush.msra.mxu0 0.0
        %1236 = vmatpush.msra.mxu0 0.0
        %1237 = vmatpush.msra.mxu0 0.0
        %1238 = vmatpush.msra.mxu0 0.0
        %1239 = vmatpush.msra.mxu0 0.0
        %1240 = vmatpush.msra.mxu0 0.0
        %1241 = vmatpush.msra.mxu0 0.0
        %1242 = vmatpush.msra.mxu0 0.0
        %1243 = vmatpush.msra.mxu0 0.0
        %1244 = vmatpush.msra.mxu0 0.0
        %1245 = vmatpush.msra.mxu0 %v1228
        %1246 = vmatmul.f32.gmra.mxu0 %v894
        %v1247 = vpop.f32.mrf.mxu0
        %v1248 = vadd.f32 0.0, %v1247
        %1249 = vmatmul.f32.gmra.mxu0 %v897
        %v1250 = vpop.f32.mrf.mxu0
        %v1251 = vadd.f32 0.0, %v1250
        %1252 = vmatmul.f32.gmra.mxu0 %v900
        %v1253 = vpop.f32.mrf.mxu0
        %v1254 = vadd.f32 0.0, %v1253
        %1255 = vmatmul.f32.gmra.mxu0 %v903
        %v1256 = vpop.f32.mrf.mxu0
        %v1257 = vadd.f32 0.0, %v1256
        %1258 = vmatmul.f32.gmra.mxu0 %v906
        %v1259 = vpop.f32.mrf.mxu0
        %v1260 = vadd.f32 0.0, %v1259
        %1261 = vmatmul.f32.gmra.mxu0 %v909
        %v1262 = vpop.f32.mrf.mxu0
        %v1263 = vadd.f32 0.0, %v1262
        %1264 = vdwg.mxu0
        %v1265 = vadd.f32 %v1221, %v1248
        %v1266 = vadd.f32 %v1222, %v1251
        %v1267 = vadd.f32 %v1223, %v1254
        %v1268 = vadd.f32 %v1224, %v1257
        %v1269 = vadd.f32 %v1225, %v1260
        %v1270 = vadd.f32 %v1226, %v1263
        %v1271 = vld [vmem:[%s5] sm:$0xff]
        %v1272 = vld [vmem:[%s5 + $0x8] sm:$0xff]
        %v1273 = vld [vmem:[%s5 + $0x10] sm:$0xff]
        %v1274 = vld [vmem:[%s5 + $0x18] sm:$0xff]
        %v1275 = vld [vmem:[%s5 + $0x20] sm:$0xff]
        %v1276 = vld [vmem:[%s5 + $0x28] sm:$0xff]
        %v1277 = vrot.slane %v1265, 7
        %v1278 = vrot.slane %v1266, 7
        %v1279 = vrot.slane %v1267, 7
        %v1280 = vrot.slane %v1268, 7
        %v1281 = vrot.slane %v1269, 7
        %v1282 = vrot.slane %v1270, 7
        %v1283 = vsel %vm532, %v1281, %v1282
        %v1284 = vsel %vm532, %v1280, %v1281
        %v1285 = vsel %vm532, %v1279, %v1280
        %v1286 = vsel %vm532, %v1278, %v1279
        %v1287 = vsel %vm532, %v1277, %v1278
        %v1288 = vsel %vm532, %v1282, %v1277
        %v1289 = vmul.f32 %v1288, %v467
        %v1290 = vmul.f32 %v1287, %v468
        %v1291 = vmul.f32 %v1286, %v469
        %v1292 = vmul.f32 %v1285, %v470
        %v1293 = vmul.f32 %v1284, %v471
        %v1294 = vmul.f32 %v1283, %v472
        %v1295 = vrot.slane %v1265, 1
        %v1296 = vrot.slane %v1266, 1
        %v1297 = vrot.slane %v1267, 1
        %v1298 = vrot.slane %v1268, 1
        %v1299 = vrot.slane %v1269, 1
        %v1300 = vrot.slane %v1270, 1
        %v1301 = vsel %vm551, %v1299, %v1300
        %v1302 = vsel %vm551, %v1298, %v1299
        %v1303 = vsel %vm551, %v1297, %v1298
        %v1304 = vsel %vm551, %v1296, %v1297
        %v1305 = vsel %vm551, %v1295, %v1296
        %v1306 = vsel %vm551, %v1300, %v1295
        %v1307 = vmul.f32 %v1305, %v510
        %v1308 = vmul.f32 %v1304, %v511
        %v1309 = vmul.f32 %v1303, %v512
        %v1310 = vmul.f32 %v1302, %v513
        %v1311 = vmul.f32 %v1301, %v514
        %v1312 = vmul.f32 %v1306, %v515
        %v1314 = vsel %vm787, %v1265, 0
        %v1317 = vsel %vm787, %v1266, 0
        %v1320 = vsel %vm787, %v1267, 0
        %v1323 = vsel %vm787, %v1268, 0
        %v1326 = vsel %vm787, %v1269, 0
        %v1329 = vsel %vm787, %v1270, 0
        %1331 = vmatpush.msra.mxu0 0.0
        %1332 = vmatpush.msra.mxu0 0.0
        %1333 = vmatpush.msra.mxu0 0.0
        %1334 = vmatpush.msra.mxu0 0.0
        %1335 = vmatpush.msra.mxu0 0.0
        %1336 = vmatpush.msra.mxu0 0.0
        %1337 = vmatpush.msra.mxu0 0.0
        %1338 = vmatpush.msra.mxu0 0.0
        %1339 = vmatpush.msra.mxu0 0.0
        %1340 = vmatpush.msra.mxu0 0.0
        %1341 = vmatpush.msra.mxu0 0.0
        %1342 = vmatpush.msra.mxu0 0.0
        %1343 = vmatpush.msra.mxu0 0.0
        %1344 = vmatpush.msra.mxu0 0.0
        %1345 = vmatpush.msra.mxu0 %v1274
        %1346 = vmatpush.msra.mxu0 %v1273
        %1347 = vmatmul.f32.gmra.mxu0 %v1314
        %v1348 = vpop.f32.mrf.mxu0
        %v1349 = vadd.f32 0.0, %v1348
        %1350 = vmatmul.f32.gmra.mxu0 %v1317
        %v1351 = vpop.f32.mrf.mxu0
        %v1352 = vadd.f32 0.0, %v1351
        %1353 = vmatmul.f32.gmra.mxu0 %v1320
        %v1354 = vpop.f32.mrf.mxu0
        %v1355 = vadd.f32 0.0, %v1354
        %1356 = vmatmul.f32.gmra.mxu0 %v1323
        %v1357 = vpop.f32.mrf.mxu0
        %v1358 = vadd.f32 0.0, %v1357
        %1359 = vmatmul.f32.gmra.mxu0 %v1326
        %v1360 = vpop.f32.mrf.mxu0
        %v1361 = vadd.f32 0.0, %v1360
        %1362 = vmatmul.f32.gmra.mxu0 %v1329
        %v1363 = vpop.f32.mrf.mxu0
        %v1364 = vadd.f32 0.0, %v1363
        %1365 = vdwg.mxu0
        %v1367 = vsel %vm787, %v1289, 0
        %v1370 = vsel %vm787, %v1290, 0
        %v1373 = vsel %vm787, %v1291, 0
        %v1376 = vsel %vm787, %v1292, 0
        %v1379 = vsel %vm787, %v1293, 0
        %v1382 = vsel %vm787, %v1294, 0
        %1384 = vmatpush.msra.mxu0 0.0
        %1385 = vmatpush.msra.mxu0 0.0
        %1386 = vmatpush.msra.mxu0 0.0
        %1387 = vmatpush.msra.mxu0 0.0
        %1388 = vmatpush.msra.mxu0 0.0
        %1389 = vmatpush.msra.mxu0 0.0
        %1390 = vmatpush.msra.mxu0 0.0
        %1391 = vmatpush.msra.mxu0 0.0
        %1392 = vmatpush.msra.mxu0 0.0
        %1393 = vmatpush.msra.mxu0 0.0
        %1394 = vmatpush.msra.mxu0 0.0
        %1395 = vmatpush.msra.mxu0 0.0
        %1396 = vmatpush.msra.mxu0 0.0
        %1397 = vmatpush.msra.mxu0 0.0
        %1398 = vmatpush.msra.mxu0 %v1272
        %1399 = vmatpush.msra.mxu0 %v1271
        %1400 = vmatmul.f32.gmra.mxu0 %v1367
        %v1401 = vpop.f32.mrf.mxu0
        %v1402 = vadd.f32 %v1349, %v1401
        %1403 = vmatmul.f32.gmra.mxu0 %v1370
        %v1404 = vpop.f32.mrf.mxu0
        %v1405 = vadd.f32 %v1352, %v1404
        %1406 = vmatmul.f32.gmra.mxu0 %v1373
        %v1407 = vpop.f32.mrf.mxu0
        %v1408 = vadd.f32 %v1355, %v1407
        %1409 = vmatmul.f32.gmra.mxu0 %v1376
        %v1410 = vpop.f32.mrf.mxu0
        %v1411 = vadd.f32 %v1358, %v1410
        %1412 = vmatmul.f32.gmra.mxu0 %v1379
        %v1413 = vpop.f32.mrf.mxu0
        %v1414 = vadd.f32 %v1361, %v1413
        %1415 = vmatmul.f32.gmra.mxu0 %v1382
        %v1416 = vpop.f32.mrf.mxu0
        %v1417 = vadd.f32 %v1364, %v1416
        %1418 = vdwg.mxu0
        %v1420 = vsel %vm787, %v1307, 0
        %v1423 = vsel %vm787, %v1308, 0
        %v1426 = vsel %vm787, %v1309, 0
        %v1429 = vsel %vm787, %v1310, 0
        %v1432 = vsel %vm787, %v1311, 0
        %v1435 = vsel %vm787, %v1312, 0
        %1437 = vmatpush.msra.mxu0 0.0
        %1438 = vmatpush.msra.mxu0 0.0
        %1439 = vmatpush.msra.mxu0 0.0
        %1440 = vmatpush.msra.mxu0 0.0
        %1441 = vmatpush.msra.mxu0 0.0
        %1442 = vmatpush.msra.mxu0 0.0
        %1443 = vmatpush.msra.mxu0 0.0
        %1444 = vmatpush.msra.mxu0 0.0
        %1445 = vmatpush.msra.mxu0 0.0
        %1446 = vmatpush.msra.mxu0 0.0
        %1447 = vmatpush.msra.mxu0 0.0
        %1448 = vmatpush.msra.mxu0 0.0
        %1449 = vmatpush.msra.mxu0 0.0
        %1450 = vmatpush.msra.mxu0 0.0
        %1451 = vmatpush.msra.mxu0 %v1276
        %1452 = vmatpush.msra.mxu0 %v1275
        %1453 = vmatmul.f32.gmra.mxu0 %v1420
        %v1454 = vpop.f32.mrf.mxu0
        %v1455 = vadd.f32 0.0, %v1454
        %1456 = vmatmul.f32.gmra.mxu0 %v1423
        %v1457 = vpop.f32.mrf.mxu0
        %v1458 = vadd.f32 0.0, %v1457
        %1459 = vmatmul.f32.gmra.mxu0 %v1426
        %v1460 = vpop.f32.mrf.mxu0
        %v1461 = vadd.f32 0.0, %v1460
        %1462 = vmatmul.f32.gmra.mxu0 %v1429
        %v1463 = vpop.f32.mrf.mxu0
        %v1464 = vadd.f32 0.0, %v1463
        %1465 = vmatmul.f32.gmra.mxu0 %v1432
        %v1466 = vpop.f32.mrf.mxu0
        %v1467 = vadd.f32 0.0, %v1466
        %1468 = vmatmul.f32.gmra.mxu0 %v1435
        %v1469 = vpop.f32.mrf.mxu0
        %v1470 = vadd.f32 0.0, %v1469
        %1471 = vdwg.mxu0
        %v1472 = vadd.f32 %v1402, %v1455
        %v1473 = vadd.f32 %v1405, %v1458
        %v1474 = vadd.f32 %v1408, %v1461
        %v1475 = vadd.f32 %v1411, %v1464
        %v1476 = vadd.f32 %v1414, %v1467
        %v1477 = vadd.f32 %v1417, %v1470
        %v1478 = vperm.slane %v384, 5
        %v1479 = vadd.f32 %v1472, %v1478
        %v1480 = vadd.f32 %v1473, %v1478
        %v1481 = vadd.f32 %v1474, %v1478
        %v1482 = vadd.f32 %v1475, %v1478
        %v1483 = vadd.f32 %v1476, %v1478
        %v1484 = vadd.f32 %v1477, %v1478
        %1485 = vmatpush.msra.mxu0 0.0
        %1486 = vmatpush.msra.mxu0 0.0
        %1487 = vmatpush.msra.mxu0 0.0
        %1488 = vmatpush.msra.mxu0 0.0
        %1489 = vmatpush.msra.mxu0 0.0
        %1490 = vmatpush.msra.mxu0 0.0
        %1491 = vmatpush.msra.mxu0 0.0
        %1492 = vmatpush.msra.mxu0 0.0
        %1493 = vmatpush.msra.mxu0 0.0
        %1494 = vmatpush.msra.mxu0 0.0
        %1495 = vmatpush.msra.mxu0 %v1484
        %1496 = vmatpush.msra.mxu0 %v1483
        %1497 = vmatpush.msra.mxu0 %v1482
        %1498 = vmatpush.msra.mxu0 %v1481
        %1499 = vmatpush.msra.mxu0 %v1480
        %1500 = vmatpush.msra.mxu0 %v1479
        %1501 = vmatmul.f32.gmra.mxu0 %v739
        %v1502 = vpop.f32.mrf.mxu0
        %v1503 = vadd.f32 0.0, %v1502
        %1504 = vdwg.mxu0
        %v1505 = vmul.f32 %v1479, %v1479
        %v1506 = vmul.f32 %v1480, %v1480
        %v1507 = vmul.f32 %v1481, %v1481
        %v1508 = vmul.f32 %v1482, %v1482
        %v1509 = vmul.f32 %v1483, %v1483
        %v1510 = vmul.f32 %v1484, %v1484
        %1511 = vmatpush.msra.mxu0 0.0
        %1512 = vmatpush.msra.mxu0 0.0
        %1513 = vmatpush.msra.mxu0 0.0
        %1514 = vmatpush.msra.mxu0 0.0
        %1515 = vmatpush.msra.mxu0 0.0
        %1516 = vmatpush.msra.mxu0 0.0
        %1517 = vmatpush.msra.mxu0 0.0
        %1518 = vmatpush.msra.mxu0 0.0
        %1519 = vmatpush.msra.mxu0 0.0
        %1520 = vmatpush.msra.mxu0 0.0
        %1521 = vmatpush.msra.mxu0 %v1510
        %1522 = vmatpush.msra.mxu0 %v1509
        %1523 = vmatpush.msra.mxu0 %v1508
        %1524 = vmatpush.msra.mxu0 %v1507
        %1525 = vmatpush.msra.mxu0 %v1506
        %1526 = vmatpush.msra.mxu0 %v1505
        %1527 = vmatmul.f32.gmra.mxu0 %v739
        %v1528 = vpop.f32.mrf.mxu0
        %v1529 = vadd.f32 0.0, %v1528
        %1530 = vdwg.mxu0
        %v1532 = vsel %vm787, %v1503, 0
        %1534 = vmatpush.msra.mxu0 0.0
        %1535 = vmatpush.msra.mxu0 0.0
        %1536 = vmatpush.msra.mxu0 0.0
        %1537 = vmatpush.msra.mxu0 0.0
        %1538 = vmatpush.msra.mxu0 0.0
        %1539 = vmatpush.msra.mxu0 0.0
        %1540 = vmatpush.msra.mxu0 0.0
        %1541 = vmatpush.msra.mxu0 0.0
        %1542 = vmatpush.msra.mxu0 0.0
        %1543 = vmatpush.msra.mxu0 0.0
        %1544 = vmatpush.msra.mxu0 0.0
        %1545 = vmatpush.msra.mxu0 0.0
        %1546 = vmatpush.msra.mxu0 0.0
        %1547 = vmatpush.msra.mxu0 0.0
        %1548 = vmatpush.msra.mxu0 %v387
        %1549 = vmatpush.msra.mxu0 %v386
        %1550 = vmatmul.f32.gmra.mxu0 %v1532
        %v1551 = vpop.f32.mrf.mxu0
        %v1552 = vadd.f32 0.0, %v1551
        %1553 = vdwg.mxu0
        %v1555 = vsel %vm787, %v1529, 0
        %1557 = vmatpush.msra.mxu0 0.0
        %1558 = vmatpush.msra.mxu0 0.0
        %1559 = vmatpush.msra.mxu0 0.0
        %1560 = vmatpush.msra.mxu0 0.0
        %1561 = vmatpush.msra.mxu0 0.0
        %1562 = vmatpush.msra.mxu0 0.0
        %1563 = vmatpush.msra.mxu0 0.0
        %1564 = vmatpush.msra.mxu0 0.0
        %1565 = vmatpush.msra.mxu0 0.0
        %1566 = vmatpush.msra.mxu0 0.0
        %1567 = vmatpush.msra.mxu0 0.0
        %1568 = vmatpush.msra.mxu0 0.0
        %1569 = vmatpush.msra.mxu0 0.0
        %1570 = vmatpush.msra.mxu0 0.0
        %1571 = vmatpush.msra.mxu0 %v387
        %1572 = vmatpush.msra.mxu0 %v386
        %1573 = vmatmul.f32.gmra.mxu0 %v1555
        %v1574 = vpop.f32.mrf.mxu0
        %v1575 = vadd.f32 0.0, %v1574
        %1576 = vdwg.mxu0
        %v1577 = vmul.f32 %v1552, %v1552
        %v1578 = vsub.f32 %v1575, %v1577
        %v1579 = vadd.f32 %v1578, 1e-05
        %v1580 = vrsqrt.pop %v1579
        %v1581 = vmul.f32 %v1580, %v1579
        %v1582 = vmul.f32 %v1581, %v1580
        %v1583 = vmul.f32 0.5, %v1582
        %v1584 = vsub.f32 1.5, %v1583
        %v1585 = vmul.f32 %v1580, %v1584
        %vm1586 = vweird.f32 %v1579
        %vm1587 = vweird.f32 %v1580
        %vm1588 = vmor %vm1586, %vm1587
        %v1589 = vsel %vm1588, %v1580, %v1585
        %v1591 = vsel %vm564, %v1552, 0
        %1593 = vmatpush.msra.mxu0 0.0
        %1594 = vmatpush.msra.mxu0 0.0
        %1595 = vmatpush.msra.mxu0 0.0
        %1596 = vmatpush.msra.mxu0 0.0
        %1597 = vmatpush.msra.mxu0 0.0
        %1598 = vmatpush.msra.mxu0 0.0
        %1599 = vmatpush.msra.mxu0 0.0
        %1600 = vmatpush.msra.mxu0 0.0
        %1601 = vmatpush.msra.mxu0 0.0
        %1602 = vmatpush.msra.mxu0 0.0
        %1603 = vmatpush.msra.mxu0 0.0
        %1604 = vmatpush.msra.mxu0 0.0
        %1605 = vmatpush.msra.mxu0 0.0
        %1606 = vmatpush.msra.mxu0 0.0
        %1607 = vmatpush.msra.mxu0 0.0
        %1608 = vmatpush.msra.mxu0 %v388
        %1609 = vmatmul.f32.gmra.mxu0 %v1591
        %v1610 = vpop.f32.mrf.mxu0
        %v1611 = vadd.f32 0.0, %v1610
        %1612 = vdwg.mxu0
        %v1614 = vsel %vm564, %v1589, 0
        %1616 = vmatpush.msra.mxu0 0.0
        %1617 = vmatpush.msra.mxu0 0.0
        %1618 = vmatpush.msra.mxu0 0.0
        %1619 = vmatpush.msra.mxu0 0.0
        %1620 = vmatpush.msra.mxu0 0.0
        %1621 = vmatpush.msra.mxu0 0.0
        %1622 = vmatpush.msra.mxu0 0.0
        %1623 = vmatpush.msra.mxu0 0.0
        %1624 = vmatpush.msra.mxu0 0.0
        %1625 = vmatpush.msra.mxu0 0.0
        %1626 = vmatpush.msra.mxu0 0.0
        %1627 = vmatpush.msra.mxu0 0.0
        %1628 = vmatpush.msra.mxu0 0.0
        %1629 = vmatpush.msra.mxu0 0.0
        %1630 = vmatpush.msra.mxu0 0.0
        %1631 = vmatpush.msra.mxu0 %v388
        %1632 = vmatmul.f32.gmra.mxu0 %v1614
        %v1633 = vpop.f32.mrf.mxu0
        %v1634 = vadd.f32 0.0, %v1633
        %1635 = vdwg.mxu0
        %v1637 = vsel %vm911, %v1611, 0
        %1639 = vmatpush.msra.mxu0 0.0
        %1640 = vmatpush.msra.mxu0 0.0
        %1641 = vmatpush.msra.mxu0 0.0
        %1642 = vmatpush.msra.mxu0 0.0
        %1643 = vmatpush.msra.mxu0 0.0
        %1644 = vmatpush.msra.mxu0 0.0
        %1645 = vmatpush.msra.mxu0 0.0
        %1646 = vmatpush.msra.mxu0 0.0
        %1647 = vmatpush.msra.mxu0 0.0
        %1648 = vmatpush.msra.mxu0 0.0
        %1649 = vmatpush.msra.mxu0 0.0
        %1650 = vmatpush.msra.mxu0 0.0
        %1651 = vmatpush.msra.mxu0 0.0
        %1652 = vmatpush.msra.mxu0 0.0
        %1653 = vmatpush.msra.mxu0 0.0
        %1654 = vmatpush.msra.mxu0 %v1637
        %1655 = vmatmul.f32.gmra.mxu0 %v894
        %v1656 = vpop.f32.mrf.mxu0
        %v1657 = vadd.f32 0.0, %v1656
        %1658 = vmatmul.f32.gmra.mxu0 %v897
        %v1659 = vpop.f32.mrf.mxu0
        %v1660 = vadd.f32 0.0, %v1659
        %1661 = vmatmul.f32.gmra.mxu0 %v900
        %v1662 = vpop.f32.mrf.mxu0
        %v1663 = vadd.f32 0.0, %v1662
        %1664 = vmatmul.f32.gmra.mxu0 %v903
        %v1665 = vpop.f32.mrf.mxu0
        %v1666 = vadd.f32 0.0, %v1665
        %1667 = vmatmul.f32.gmra.mxu0 %v906
        %v1668 = vpop.f32.mrf.mxu0
        %v1669 = vadd.f32 0.0, %v1668
        %1670 = vmatmul.f32.gmra.mxu0 %v909
        %v1671 = vpop.f32.mrf.mxu0
        %v1672 = vadd.f32 0.0, %v1671
        %1673 = vdwg.mxu0
        %v1675 = vsel %vm911, %v1634, 0
        %1677 = vmatpush.msra.mxu0 0.0
        %1678 = vmatpush.msra.mxu0 0.0
        %1679 = vmatpush.msra.mxu0 0.0
        %1680 = vmatpush.msra.mxu0 0.0
        %1681 = vmatpush.msra.mxu0 0.0
        %1682 = vmatpush.msra.mxu0 0.0
        %1683 = vmatpush.msra.mxu0 0.0
        %1684 = vmatpush.msra.mxu0 0.0
        %1685 = vmatpush.msra.mxu0 0.0
        %1686 = vmatpush.msra.mxu0 0.0
        %1687 = vmatpush.msra.mxu0 0.0
        %1688 = vmatpush.msra.mxu0 0.0
        %1689 = vmatpush.msra.mxu0 0.0
        %1690 = vmatpush.msra.mxu0 0.0
        %1691 = vmatpush.msra.mxu0 0.0
        %1692 = vmatpush.msra.mxu0 %v1675
        %1693 = vmatmul.f32.gmra.mxu0 %v894
        %v1694 = vpop.f32.mrf.mxu0
        %v1695 = vadd.f32 0.0, %v1694
        %1696 = vmatmul.f32.gmra.mxu0 %v897
        %v1697 = vpop.f32.mrf.mxu0
        %v1698 = vadd.f32 0.0, %v1697
        %1699 = vmatmul.f32.gmra.mxu0 %v900
        %v1700 = vpop.f32.mrf.mxu0
        %v1701 = vadd.f32 0.0, %v1700
        %1702 = vmatmul.f32.gmra.mxu0 %v903
        %v1703 = vpop.f32.mrf.mxu0
        %v1704 = vadd.f32 0.0, %v1703
        %1705 = vmatmul.f32.gmra.mxu0 %v906
        %v1706 = vpop.f32.mrf.mxu0
        %v1707 = vadd.f32 0.0, %v1706
        %1708 = vmatmul.f32.gmra.mxu0 %v909
        %v1709 = vpop.f32.mrf.mxu0
        %v1710 = vadd.f32 0.0, %v1709
        %1711 = vdwg.mxu0
        %v1712 = vsub.f32 %v1479, %v1657
        %v1713 = vsub.f32 %v1480, %v1660
        %v1714 = vsub.f32 %v1481, %v1663
        %v1715 = vsub.f32 %v1482, %v1666
        %v1716 = vsub.f32 %v1483, %v1669
        %v1717 = vsub.f32 %v1484, %v1672
        %v1718 = vmul.f32 %v1712, %v1695
        %v1719 = vmul.f32 %v1713, %v1698
        %v1720 = vmul.f32 %v1714, %v1701
        %v1721 = vmul.f32 %v1715, %v1704
        %v1722 = vmul.f32 %v1716, %v1707
        %v1723 = vmul.f32 %v1717, %v1710
        %v1724 = vperm.slane %v384, 6
        %v1725 = vmul.f32 %v1718, %v1724
        %v1726 = vmul.f32 %v1719, %v1724
        %v1727 = vmul.f32 %v1720, %v1724
        %v1728 = vmul.f32 %v1721, %v1724
        %v1729 = vmul.f32 %v1722, %v1724
        %v1730 = vmul.f32 %v1723, %v1724
        %v1731 = vperm.slane %v384, 7
        %v1732 = vadd.f32 %v1725, %v1731
        %v1733 = vadd.f32 %v1726, %v1731
        %v1734 = vadd.f32 %v1727, %v1731
        %v1735 = vadd.f32 %v1728, %v1731
        %v1736 = vadd.f32 %v1729, %v1731
        %v1737 = vadd.f32 %v1730, %v1731
        %v1738 = vmax.f32 %v1732, 0.0
        %v1739 = vmax.f32 %v1733, 0.0
        %v1740 = vmax.f32 %v1734, 0.0
        %v1741 = vmax.f32 %v1735, 0.0
        %v1742 = vmax.f32 %v1736, 0.0
        %v1743 = vmax.f32 %v1737, 0.0
        %v1744 = vand.u32 2147483647, %v1732
        %v1745 = vand.u32 2147483647, %v1733
        %v1746 = vand.u32 2147483647, %v1734
        %v1747 = vand.u32 2147483647, %v1735
        %v1748 = vand.u32 2147483647, %v1736
        %v1749 = vand.u32 2147483647, %v1737
        %v1750 = vsub.f32 0.0, %v1744
        %v1751 = vsub.f32 0.0, %v1745
        %v1752 = vsub.f32 0.0, %v1746
        %v1753 = vsub.f32 0.0, %v1747
        %v1754 = vsub.f32 0.0, %v1748
        %v1755 = vsub.f32 0.0, %v1749
        %v1756 = vmul.f32 %v1750, 1.442695
        %v1757 = vpow.pop %v1756
        %v1758 = vmul.f32 %v1751, 1.442695
        %v1759 = vpow.pop %v1758
        %v1760 = vmul.f32 %v1752, 1.442695
        %v1761 = vpow.pop %v1760
        %v1762 = vmul.f32 %v1753, 1.442695
        %v1763 = vpow.pop %v1762
        %v1764 = vmul.f32 %v1754, 1.442695
        %v1765 = vpow.pop %v1764
        %v1766 = vmul.f32 %v1755, 1.442695
        %v1767 = vpow.pop %v1766
        %v1768 = vadd.f32 %v1757, 1.0
        %v1769 = vadd.f32 %v1759, 1.0
        %v1770 = vadd.f32 %v1761, 1.0
        %v1771 = vadd.f32 %v1763, 1.0
        %v1772 = vadd.f32 %v1765, 1.0
        %v1773 = vadd.f32 %v1767, 1.0
        %v1774 = vlog2.pop %v1768
        %v1775 = vmul.f32 %v1774, 0.6931472
        %v1776 = vlog2.pop %v1769
        %v1777 = vmul.f32 %v1776, 0.6931472
        %v1778 = vlog2.pop %v1770
        %v1779 = vmul.f32 %v1778, 0.6931472
        %v1780 = vlog2.pop %v1771
        %v1781 = vmul.f32 %v1780, 0.6931472
        %v1782 = vlog2.pop %v1772
        %v1783 = vmul.f32 %v1782, 0.6931472
        %v1784 = vlog2.pop %v1773
        %v1785 = vmul.f32 %v1784, 0.6931472
        %v1786 = vadd.f32 %v1738, %v1775
        %v1787 = vadd.f32 %v1739, %v1777
        %v1788 = vadd.f32 %v1740, %v1779
        %v1789 = vadd.f32 %v1741, %v1781
        %v1790 = vadd.f32 %v1742, %v1783
        %v1791 = vadd.f32 %v1743, %v1785
        %v1792 = vtanh.pop %v1786
        %v1793 = vtanh.pop %v1787
        %v1794 = vtanh.pop %v1788
        %v1795 = vtanh.pop %v1789
        %v1796 = vtanh.pop %v1790
        %v1797 = vtanh.pop %v1791
        %v1798 = vmul.f32 %v1732, %v1792
        %v1799 = vmul.f32 %v1733, %v1793
        %v1800 = vmul.f32 %v1734, %v1794
        %v1801 = vmul.f32 %v1735, %v1795
        %v1802 = vmul.f32 %v1736, %v1796
        %v1803 = vmul.f32 %v1737, %v1797
        %v1804 = vld [vmem:[#allocation2] sm:$0xff]
        %v1805 = vperm.slane %v385, 0
        %1806 = vmatpush.msra.mxu0 0.0
        %1807 = vmatpush.msra.mxu0 0.0
        %1808 = vmatpush.msra.mxu0 0.0
        %1809 = vmatpush.msra.mxu0 0.0
        %1810 = vmatpush.msra.mxu0 0.0
        %1811 = vmatpush.msra.mxu0 0.0
        %1812 = vmatpush.msra.mxu0 0.0
        %1813 = vmatpush.msra.mxu0 0.0
        %1814 = vmatpush.msra.mxu0 0.0
        %1815 = vmatpush.msra.mxu0 0.0
        %1816 = vmatpush.msra.mxu0 0.0
        %1817 = vmatpush.msra.mxu0 0.0
        %1818 = vmatpush.msra.mxu0 0.0
        %1819 = vmatpush.msra.mxu0 0.0
        %1820 = vmatpush.msra.mxu0 0.0
        %1821 = vmatpush.msra.mxu0 %v1804
        %1822 = vmatmul.f32.gmra.mxu0 %v566
        %v1823 = vpop.f32.mrf.mxu0
        %v1824 = vadd.f32 %v1805, %v1823
        %1825 = vmatmul.f32.gmra.mxu0 %v569
        %v1826 = vpop.f32.mrf.mxu0
        %v1827 = vadd.f32 %v1805, %v1826
        %1828 = vmatmul.f32.gmra.mxu0 %v572
        %v1829 = vpop.f32.mrf.mxu0
        %v1830 = vadd.f32 %v1805, %v1829
        %1831 = vmatmul.f32.gmra.mxu0 %v575
        %v1832 = vpop.f32.mrf.mxu0
        %v1833 = vadd.f32 %v1805, %v1832
        %1834 = vmatmul.f32.gmra.mxu0 %v578
        %v1835 = vpop.f32.mrf.mxu0
        %v1836 = vadd.f32 %v1805, %v1835
        %1837 = vmatmul.f32.gmra.mxu0 %v581
        %v1838 = vpop.f32.mrf.mxu0
        %v1839 = vadd.f32 %v1805, %v1838
        %1840 = vdwg.mxu0
        %v1841 = vadd.f32 %v1798, %v1824
        %v1842 = vadd.f32 %v1799, %v1827
        %v1843 = vadd.f32 %v1800, %v1830
        %v1844 = vadd.f32 %v1801, %v1833
        %v1845 = vadd.f32 %v1802, %v1836
        %v1846 = vadd.f32 %v1803, %v1839
        %1847 = vst.msk [vmem:[%s376] sm:$0xff] %vm787, %v1841
        %1848 = vst.msk [vmem:[%s376 + $0x8] sm:$0xff] %vm787, %v1842
        %1849 = vst.msk [vmem:[%s376 + $0x10] sm:$0xff] %vm787, %v1843
        %1850 = vst.msk [vmem:[%s376 + $0x18] sm:$0xff] %vm787, %v1844
        %1851 = vst.msk [vmem:[%s376 + $0x20] sm:$0xff] %vm787, %v1845
        %1852 = vst.msk [vmem:[%s376 + $0x28] sm:$0xff] %vm787, %v1846
        %s1853 = smul.u32 6, %s22
        %p1854 = scmp.lt.s32.totalorder %s1853, 11
        %s1855 = scalar_select %p1854, %s1853, 11
        %s1856 = smul.addr %s1855, 8
        %s1857 = scalar_lea.vmem %s10, %s1856
        // Predicated region
        $region65: #{_lambda_.1} parent=59 // pred_check
          %p1858 = pneg %p255
        $region66: #{_lambda_.1} parent=59 // pred_check_branch
          %1860 = sbr.rel (%p1858) target = $region68
        $region67: #{_lambda_.1} parent=59 // pred_region
          %s1861 = smul.u32 6, %s22
        $region68: #{_lambda_.1} parent=59 // pred_fallthru
          _
      $region60: #{_lambda_.1} parent=5 // pred_fallthru
        _
      %p1862 = scmp.le.s32.totalorder 2, %s17
      // Predicated region
      $region69: #{_lambda_.1} parent=5 // pred_check
        %p1863 = pneg %p1862
      $region70: #{_lambda_.1} parent=5 // pred_check_branch
        %1865 = sbr.rel (%p1863) target = $region72
      $region71: #{_lambda_.1} parent=5 // pred_region
        %s1866 = ssub.s32 %s17, 2
        // Predicated region
        $region73: #{_lambda_.1} parent=71 // pred_check
          %p1867 = pneg %p261
        $region74: #{_lambda_.1} parent=71 // pred_check_branch
          %1869 = sbr.rel (%p1867) target = $region76
        $region75: #{_lambda_.1} parent=71 // pred_region
          %s1870 = smul.u32 6, %s23
          %p1871 = scmp.lt.s32.totalorder %s1870, 11
          %s1872 = scalar_select %p1871, %s1870, 11
          %s1873 = smul.addr %s1872, 8
          %s1874 = scalar_lea.vmem %s10, %s1873
        $region76: #{_lambda_.1} parent=71 // pred_fallthru
          _
      $region72: #{_lambda_.1} parent=5 // pred_fallthru
        _
    $region6: #{_lambda_.1} parent=1 // loop_footer
      %s21 = sadd.s32 1, %s17
    $region7: #{_lambda_.1} parent=1 // loop_footer_branch
      %16 = sbr.rel target = $region3
    $region8: #{_lambda_.1} parent=1 // loop_exit
      _
    %1875 = vsyncpa [#allocation3], 1
    %s1876 = scalar_lea.sflag [#allocation3], 1
    %1877 = vsyncpa %s1876, 1

</llo_original>
